<compile_context>
chip_gen: v7x
topology: tpu7x:2x2x1
jax: 0.10.0
libtpu: 0.0.40
codegen_flags: <defaults>
</compile_context>

<pallas_src>
import functools

import jax
import jax.numpy as jnp
from jax.experimental import pallas as pl
from jax.experimental.pallas import tpu as pltpu

LN_EPS = 1e-5  # PyTorch nn.LayerNorm default


def _layer_norm(x, gamma, beta):
    # x: (M, D) f32, gamma/beta: (1, D) f32
    mean = jnp.mean(x, axis=-1, keepdims=True)
    centered = x - mean
    var = jnp.mean(centered * centered, axis=-1, keepdims=True)
    inv = jax.lax.rsqrt(var + LN_EPS)          # EUP
    return centered * inv * gamma + beta


def _encoder_block_kernel(
    x_ref,      # (Bt, S, D)   f32
    wqkv_ref,   # (D, 3D)      mxu_dtype   [ Wq*scale | Wk | Wv ] along out dim
    bqkv_ref,   # (1, 3D)      f32         [ bq*scale | bk | bv ]
    wo_ref,     # (D, D)       mxu_dtype
    w1_ref,     # (D, Dff)     mxu_dtype
    b1_ref,     # (1, Dff)     f32
    w2_ref,     # (Dff, D)     mxu_dtype
    vecs_ref,   # (6, D)       f32         bo, g1, be1, bb2, g2, be2
    o_ref,      # (Bt, S, D)
    *, num_heads: int, mxu_dtype,
):
    Bt, S, D = x_ref.shape
    H = num_heads
    dh = D // H
    M = Bt * S

    # Fold batch rows into the matmul M dimension (layout-preserving: S % 8 == 0
    # keeps the (sublane, lane) tiling identical).
    x = x_ref[...].reshape(M, D)                     # (M, D) f32

    vecs = vecs_ref[...]                             # (6, D) f32
    bo, g1, be1 = vecs[0:1, :], vecs[1:2, :], vecs[2:3, :]
    bb2, g2, be2 = vecs[3:4, :], vecs[4:5, :], vecs[5:6, :]

    # ---- Fused Q/K/V projection: one lane-dense matmul, N = 3D ----
    x_mx = x.astype(mxu_dtype)
    qkv = jnp.dot(x_mx, wqkv_ref[...],
                  preferred_element_type=jnp.float32) + bqkv_ref[...]   # (M, 3D) f32
    qkv_mx = qkv.astype(mxu_dtype)   # single downstream cast; softmax scale already in Wq/bq

    # ---- Scaled dot-product attention, per (batch row-block, head) ----
    # Static (unrolled) loops over Bt and H; per-head data are static lane
    # slices of the (M, 3D) QKV slab (free at real dh = multiple of 128).
    ctx_batches = []
    for b in range(Bt):
        r0 = b * S
        head_ctx = []
        for h in range(H):
            q = qkv_mx[r0:r0 + S, h * dh:(h + 1) * dh]                 # (S, dh)
            k = qkv_mx[r0:r0 + S, D + h * dh:D + (h + 1) * dh]         # (S, dh)
            v = qkv_mx[r0:r0 + S, 2 * D + h * dh:2 * D + (h + 1) * dh]  # (S, dh)

            s = jnp.einsum("qd,kd->qk", q, k,
                           preferred_element_type=jnp.float32)          # (S, S) f32
            # TODO(synk): keyPaddingMask support omitted (forward is exercised
            # with paddingMask=None).
            m = jnp.max(s, axis=-1, keepdims=True)
            e = jnp.exp(s - m)
            denom = jnp.sum(e, axis=-1, keepdims=True)
            p = e * pl.reciprocal(denom, approx=True)                    # EUP, not VALU divide

            head_ctx.append(jnp.dot(p.astype(mxu_dtype), v,
                                    preferred_element_type=jnp.float32))  # (S, dh) f32
        ctx_batches.append(jnp.concatenate(head_ctx, axis=-1))           # (S, D) f32
    ctx = ctx_batches[0] if Bt == 1 else jnp.concatenate(ctx_batches, axis=0)
    ctx = ctx.astype(mxu_dtype)                                          # (M, D)

    # ---- Output projection: single K = D contraction (heads fused by lane-concat) ----
    attn_out = jnp.dot(ctx, wo_ref[...],
                       preferred_element_type=jnp.float32) + bo          # (M, D) f32

    # ---- Residual 1: x + dropout(LN1(attn_out)); dropout = identity ----
    x1 = x + _layer_norm(attn_out, g1, be1)

    # ---- Position-wise feed-forward: Linear -> ReLU -> Linear ----
    h1 = jnp.dot(x1.astype(mxu_dtype), w1_ref[...],
                 preferred_element_type=jnp.float32) + b1_ref[...]
    h1 = jnp.maximum(h1, 0.0)
    ff = jnp.dot(h1.astype(mxu_dtype), w2_ref[...],
                 preferred_element_type=jnp.float32) + bb2

    # ---- Residual 2: x1 + dropout(LN2(ff)) ----
    out = x1 + _layer_norm(ff, g2, be2)
    o_ref[...] = out.reshape(Bt, S, D).astype(o_ref.dtype)


def _pack_params(params, num_heads, mxu_dtype):
    """Pack the 16 small parameter tensors into 7 kernel inputs (wrapper-side XLA)."""
    D = params["wq"].shape[0]
    dh = D // num_heads
    scale = jnp.float32(1.0 / (dh ** 0.5))
    f32 = jnp.float32

    def vec(key, n):
        return jnp.reshape(params[key], (n,)).astype(f32)

    # Fold the softmax 1/sqrt(dh) scale into the Q projection (zero kernel cost).
    wq = params["wq"].astype(f32) * scale
    bq = vec("bq", D) * scale
    wqkv = jnp.concatenate(
        [wq, params["wk"].astype(f32), params["wv"].astype(f32)], axis=1
    ).astype(mxu_dtype)                                                  # (D, 3D)
    bqkv = jnp.concatenate([bq, vec("bk", D), vec("bv", D)])[None, :]     # (1, 3D) f32

    wo = params["wo"].astype(mxu_dtype)                                   # (D, D)
    w1 = params["w1"].astype(mxu_dtype)                                   # (D, Dff)
    Dff = params["w1"].shape[1]
    assert params["w2"].shape == (Dff, D), "w2 must be (hidden_dim, d_model)"
    w2 = params["w2"].astype(mxu_dtype)                                   # (Dff, D)
    b1 = jnp.reshape(params["bb1"], (1, Dff)).astype(f32)                 # (1, Dff)

    vecs = jnp.stack([vec("bo", D), vec("g1", D), vec("be1", D),
                      vec("bb2", D), vec("g2", D), vec("be2", D)], axis=0)  # (6, D) f32
    return wqkv, bqkv, wo, w1, b1, w2, vecs


def encoder_block(x, params, *, num_heads, mxu_dtype=jnp.bfloat16, min_grid_steps=2):
    B, S, D = x.shape
    assert D % num_heads == 0, f"model dim {D} not divisible by num_heads {num_heads}"

    # Fold as many batch rows as possible into the matmul M dimension while
    # keeping >= min_grid_steps parallel grid steps (v7x has 2 TensorCores).
    steps = B
    for d in range(min(min_grid_steps, B), B + 1):
        if B % d == 0:
            steps = d
            break
    bt = B // steps

    wqkv, bqkv, wo, w1, b1, w2, vecs = _pack_params(params, num_heads, mxu_dtype)

    kernel = functools.partial(_encoder_block_kernel,
                               num_heads=num_heads, mxu_dtype=mxu_dtype)

    def const(arr):
        nd = arr.ndim
        return pl.BlockSpec(arr.shape, lambda b, _n=nd: (0,) * _n)

    # Explicit VMEM budget from the real block sizes (x/out f32 + packed weights),
    # with generous headroom for double-buffering and intermediates.
    weight_bytes = sum(int(a.size) * a.dtype.itemsize
                       for a in (wqkv, bqkv, wo, w1, b1, w2, vecs))
    io_bytes = 2 * bt * S * D * 4
    vmem_limit = int(min(100 * (1 << 20), max(8 * (1 << 20), 6 * (weight_bytes + io_bytes))))

    return pl.pallas_call(
        kernel,
        out_shape=jax.ShapeDtypeStruct((B, S, D), x.dtype),
        grid_spec=pltpu.PrefetchScalarGridSpec(
            num_scalar_prefetch=0,
            grid=(steps,),
            in_specs=[
                pl.BlockSpec((bt, S, D), lambda b: (b, 0, 0)),   # x
                const(wqkv),                                      # packed QKV weights (D, 3D)
                const(bqkv),                                      # packed QKV biases  (1, 3D)
                const(wo),                                        # output projection  (D, D)
                const(w1),                                        # FF W1              (D, Dff)
                const(b1),                                        # FF b1              (1, Dff)
                const(w2),                                        # FF W2              (Dff, D)
                const(vecs),                                      # bo + LN vectors    (6, D)
            ],
            out_specs=pl.BlockSpec((bt, S, D), lambda b: (b, 0, 0)),
        ),
        compiler_params=pltpu.CompilerParams(
            dimension_semantics=("parallel",),
            vmem_limit_bytes=vmem_limit,
        ),
    )(x, wqkv, bqkv, wo, w1, b1, w2, vecs)


# ----------------------------------------------------------------------------
# Pure-JAX f32 reference (mirrors the PyTorch EncoderBlock forward) for checking.
# ----------------------------------------------------------------------------
def encoder_block_reference(x, params, *, num_heads):
    B, S, D = x.shape
    H = num_heads
    dh = D // H

    def ln(v, g, b):
        mu = jnp.mean(v, axis=-1, keepdims=True)
        var = jnp.mean((v - mu) ** 2, axis=-1, keepdims=True)
        return (v - mu) * jax.lax.rsqrt(var + LN_EPS) * g + b

    q = x @ params["wq"] + params["bq"]
    k = x @ params["wk"] + params["bk"]
    v = x @ params["wv"] + params["bv"]
    split = lambda t: jnp.transpose(t.reshape(B, S, H, dh), (0, 2, 1, 3))
    qh, kh, vh = split(q), split(k), split(v)
    scores = jnp.einsum("bhqd,bhkd->bhqk", qh, kh) / (dh ** 0.5)
    p = jax.nn.softmax(scores, axis=-1)
    ctx = jnp.einsum("bhqk,bhkd->bhqd", p, vh)
    ctx = jnp.transpose(ctx, (0, 2, 1, 3)).reshape(B, S, D)
    attn = ctx @ params["wo"] + params["bo"]
    x1 = x + ln(attn, params["g1"], params["be1"])           # dropout = identity
    h1 = jnp.maximum(x1 @ params["w1"] + params["bb1"], 0.0)
    ff = h1 @ params["w2"] + params["bb2"]
    return x1 + ln(ff, params["g2"], params["be2"])


def init_params(key, d_model, hidden_dim=None):
    hidden_dim = d_model if hidden_dim is None else hidden_dim
    ks = jax.random.split(key, 16)
    s = 0.05

    def lin(kw, i, o):
        return jax.random.normal(kw, (i, o), jnp.float32) * s

    def vecr(kw, n, scale=0.02):
        return jax.random.normal(kw, (n,), jnp.float32) * scale

    return {
        # attention projections, (in, out) layout; biases (D,)
        "wq": lin(ks[0], d_model, d_model), "bq": vecr(ks[1], d_model),
        "wk": lin(ks[2], d_model, d_model), "bk": vecr(ks[3], d_model),
        "wv": lin(ks[4], d_model, d_model), "bv": vecr(ks[5], d_model),
        "wo": lin(ks[6], d_model, d_model), "bo": vecr(ks[7], d_model),
        # LayerNorm 1
        "g1": 1.0 + vecr(ks[8], d_model), "be1": vecr(ks[9], d_model),
        # PositionWiseFeedForward(d_model, d_model): Linear -> ReLU -> Linear
        "w1": lin(ks[10], d_model, hidden_dim), "bb1": vecr(ks[11], hidden_dim),
        "w2": lin(ks[12], hidden_dim, d_model), "bb2": vecr(ks[13], d_model),
        # LayerNorm 2
        "g2": 1.0 + vecr(ks[14], d_model), "be2": vecr(ks[15], d_model),
    }


if __name__ == "__main__":
    B, S, D = 2, 8, 32          # batch, seq_len, headDimension (model dim)
    NUM_HEADS = 4               # numberHeads; per-head dim = 8

    key = jax.random.PRNGKey(0)
    kx, kp = jax.random.split(key)
    x = jax.random.normal(kx, (B, S, D), jnp.float32)
    params = init_params(kp, D)

    out = jax.block_until_ready(encoder_block(x, params, num_heads=NUM_HEADS))
    assert out.shape == (B, S, D)
    assert bool(jnp.all(jnp.isfinite(out)))

    # Tolerance check vs the f32 reference (kernel uses bf16 MXU operands and
    # an approximate EUP reciprocal in softmax, so allow a loose bound).
    ref = encoder_block_reference(x, params, num_heads=NUM_HEADS)
    max_err = float(jnp.max(jnp.abs(out - ref)))
    assert max_err < 0.15, f"kernel/reference mismatch: max abs err {max_err}"

    print("KERNEL_OK")
</pallas_src>

<mosaic_0001>
module attributes {stable_mosaic.version = 11 : i64} {
  func.func @_encoder_block_kernel(%arg0: i32, %arg1: memref<1x8x32xf32, #tpu.memory_space<vmem>>, %arg2: memref<32x96xbf16, #tpu.memory_space<vmem>>, %arg3: memref<1x96xf32, #tpu.memory_space<vmem>>, %arg4: memref<32x32xbf16, #tpu.memory_space<vmem>>, %arg5: memref<32x32xbf16, #tpu.memory_space<vmem>>, %arg6: memref<1x32xf32, #tpu.memory_space<vmem>>, %arg7: memref<32x32xbf16, #tpu.memory_space<vmem>>, %arg8: memref<6x32xf32, #tpu.memory_space<vmem>>, %arg9: memref<1x8x32xf32, #tpu.memory_space<vmem>>) attributes {dimension_semantics = [#tpu.dimension_semantics<parallel>], iteration_bounds = array<i64: 2>, scalar_prefetch = 0 : i64, scratch_operands = 0 : i64, tpu.core_type = #tpu.core_type<tc>, window_params = [{transform_indices = @transform_0, window_bounds = array<i64: 1, 8, 32>}, {pipeline_mode = #tpu.pipeline_mode<synchronous>, transform_indices = @transform_1, window_bounds = array<i64: 32, 96>}, {pipeline_mode = #tpu.pipeline_mode<synchronous>, transform_indices = @transform_2, window_bounds = array<i64: 1, 96>}, {pipeline_mode = #tpu.pipeline_mode<synchronous>, transform_indices = @transform_3, window_bounds = array<i64: 32, 32>}, {pipeline_mode = #tpu.pipeline_mode<synchronous>, transform_indices = @transform_4, window_bounds = array<i64: 32, 32>}, {pipeline_mode = #tpu.pipeline_mode<synchronous>, transform_indices = @transform_5, window_bounds = array<i64: 1, 32>}, {pipeline_mode = #tpu.pipeline_mode<synchronous>, transform_indices = @transform_6, window_bounds = array<i64: 32, 32>}, {pipeline_mode = #tpu.pipeline_mode<synchronous>, transform_indices = @transform_7, window_bounds = array<i64: 6, 32>}, {transform_indices = @transform_8, window_bounds = array<i64: 1, 8, 32>}]} {
    %c0 = arith.constant 0 : index
    %c0_0 = arith.constant 0 : index
    %c0_1 = arith.constant 0 : index
    %0 = vector.load %arg1[%c0, %c0_0, %c0_1] : memref<1x8x32xf32, #tpu.memory_space<vmem>>, vector<1x8x32xf32>
    %1 = vector.shape_cast %0 : vector<1x8x32xf32> to vector<8x32xf32>
    %c0_2 = arith.constant 0 : index
    %c0_3 = arith.constant 0 : index
    %2 = vector.load %arg8[%c0_2, %c0_3] : memref<6x32xf32, #tpu.memory_space<vmem>>, vector<6x32xf32>
    %3 = vector.extract_strided_slice %2 {offsets = [0, 0], sizes = [1, 32], strides = [1, 1]} : vector<6x32xf32> to vector<1x32xf32>
    %4 = vector.extract_strided_slice %2 {offsets = [1, 0], sizes = [1, 32], strides = [1, 1]} : vector<6x32xf32> to vector<1x32xf32>
    %5 = vector.extract_strided_slice %2 {offsets = [2, 0], sizes = [1, 32], strides = [1, 1]} : vector<6x32xf32> to vector<1x32xf32>
    %6 = vector.extract_strided_slice %2 {offsets = [3, 0], sizes = [1, 32], strides = [1, 1]} : vector<6x32xf32> to vector<1x32xf32>
    %7 = vector.extract_strided_slice %2 {offsets = [4, 0], sizes = [1, 32], strides = [1, 1]} : vector<6x32xf32> to vector<1x32xf32>
    %8 = vector.extract_strided_slice %2 {offsets = [5, 0], sizes = [1, 32], strides = [1, 1]} : vector<6x32xf32> to vector<1x32xf32>
    %9 = arith.truncf %1 : vector<8x32xf32> to vector<8x32xbf16>
    %c0_4 = arith.constant 0 : index
    %c0_5 = arith.constant 0 : index
    %10 = vector.load %arg2[%c0_4, %c0_5] : memref<32x96xbf16, #tpu.memory_space<vmem>>, vector<32x96xbf16>
    %cst = arith.constant dense<0.000000e+00> : vector<8x96xf32>
    %11 = tpu.matmul %9, %10, %cst {dimension_numbers = #tpu.dot_dimension_numbers<[1], [0], [0], [1], [0, 0, 1, 1], [], []>} : vector<8x32xbf16>, vector<32x96xbf16>, vector<8x96xf32> -> vector<8x96xf32>
    %c0_6 = arith.constant 0 : index
    %c0_7 = arith.constant 0 : index
    %12 = vector.load %arg3[%c0_6, %c0_7] : memref<1x96xf32, #tpu.memory_space<vmem>>, vector<1x96xf32>
    %13 = vector.broadcast %12 : vector<1x96xf32> to vector<8x96xf32>
    %14 = arith.addf %11, %13 : vector<8x96xf32>
    %15 = arith.truncf %14 : vector<8x96xf32> to vector<8x96xbf16>
    %16 = vector.extract_strided_slice %15 {offsets = [0, 0], sizes = [8, 8], strides = [1, 1]} : vector<8x96xbf16> to vector<8x8xbf16>
    %17 = vector.extract_strided_slice %15 {offsets = [0, 32], sizes = [8, 8], strides = [1, 1]} : vector<8x96xbf16> to vector<8x8xbf16>
    %18 = vector.extract_strided_slice %15 {offsets = [0, 64], sizes = [8, 8], strides = [1, 1]} : vector<8x96xbf16> to vector<8x8xbf16>
    "tpu.trace_start"() <{level = 10 : i32, message = "qd,kd->qk"}> : () -> ()
    %cst_8 = arith.constant dense<0.000000e+00> : vector<8x8xf32>
    %19 = tpu.matmul %16, %17, %cst_8 {dimension_numbers = #tpu.dot_dimension_numbers<[1], [1], [0], [0], [0, 0, 1, 0], [], []>} : vector<8x8xbf16>, vector<8x8xbf16>, vector<8x8xf32> -> vector<8x8xf32>
    "tpu.trace_stop"() : () -> ()
    %cst_9 = arith.constant dense<0xFF800000> : vector<8xf32>
    %20 = vector.multi_reduction <maximumf>, %19, %cst_9 [1] : vector<8x8xf32> to vector<8xf32>
    %21 = vector.shape_cast %20 : vector<8xf32> to vector<8x1xf32>
    %22 = vector.broadcast %21 : vector<8x1xf32> to vector<8x8xf32>
    %23 = arith.subf %19, %22 : vector<8x8xf32>
    %24 = math.exp %23 : vector<8x8xf32>
    %cst_10 = arith.constant dense<0.000000e+00> : vector<8xf32>
    %25 = vector.multi_reduction <add>, %24, %cst_10 [1] : vector<8x8xf32> to vector<8xf32>
    %26 = vector.shape_cast %25 : vector<8xf32> to vector<8x1xf32>
    %27 = tpu.reciprocal %26 {approx = true} : vector<8x1xf32> -> vector<8x1xf32>
    %28 = vector.broadcast %27 : vector<8x1xf32> to vector<8x8xf32>
    %29 = arith.mulf %24, %28 : vector<8x8xf32>
    %30 = arith.truncf %29 : vector<8x8xf32> to vector<8x8xbf16>
    %cst_11 = arith.constant dense<0.000000e+00> : vector<8x8xf32>
    %31 = tpu.matmul %30, %18, %cst_11 {dimension_numbers = #tpu.dot_dimension_numbers<[1], [0], [0], [1], [0, 0, 1, 1], [], []>} : vector<8x8xbf16>, vector<8x8xbf16>, vector<8x8xf32> -> vector<8x8xf32>
    %32 = vector.extract_strided_slice %15 {offsets = [0, 8], sizes = [8, 8], strides = [1, 1]} : vector<8x96xbf16> to vector<8x8xbf16>
    %33 = vector.extract_strided_slice %15 {offsets = [0, 40], sizes = [8, 8], strides = [1, 1]} : vector<8x96xbf16> to vector<8x8xbf16>
    %34 = vector.extract_strided_slice %15 {offsets = [0, 72], sizes = [8, 8], strides = [1, 1]} : vector<8x96xbf16> to vector<8x8xbf16>
    "tpu.trace_start"() <{level = 10 : i32, message = "qd,kd->qk"}> : () -> ()
    %cst_12 = arith.constant dense<0.000000e+00> : vector<8x8xf32>
    %35 = tpu.matmul %32, %33, %cst_12 {dimension_numbers = #tpu.dot_dimension_numbers<[1], [1], [0], [0], [0, 0, 1, 0], [], []>} : vector<8x8xbf16>, vector<8x8xbf16>, vector<8x8xf32> -> vector<8x8xf32>
    "tpu.trace_stop"() : () -> ()
    %cst_13 = arith.constant dense<0xFF800000> : vector<8xf32>
    %36 = vector.multi_reduction <maximumf>, %35, %cst_13 [1] : vector<8x8xf32> to vector<8xf32>
    %37 = vector.shape_cast %36 : vector<8xf32> to vector<8x1xf32>
    %38 = vector.broadcast %37 : vector<8x1xf32> to vector<8x8xf32>
    %39 = arith.subf %35, %38 : vector<8x8xf32>
    %40 = math.exp %39 : vector<8x8xf32>
    %cst_14 = arith.constant dense<0.000000e+00> : vector<8xf32>
    %41 = vector.multi_reduction <add>, %40, %cst_14 [1] : vector<8x8xf32> to vector<8xf32>
    %42 = vector.shape_cast %41 : vector<8xf32> to vector<8x1xf32>
    %43 = tpu.reciprocal %42 {approx = true} : vector<8x1xf32> -> vector<8x1xf32>
    %44 = vector.broadcast %43 : vector<8x1xf32> to vector<8x8xf32>
    %45 = arith.mulf %40, %44 : vector<8x8xf32>
    %46 = arith.truncf %45 : vector<8x8xf32> to vector<8x8xbf16>
    %cst_15 = arith.constant dense<0.000000e+00> : vector<8x8xf32>
    %47 = tpu.matmul %46, %34, %cst_15 {dimension_numbers = #tpu.dot_dimension_numbers<[1], [0], [0], [1], [0, 0, 1, 1], [], []>} : vector<8x8xbf16>, vector<8x8xbf16>, vector<8x8xf32> -> vector<8x8xf32>
    %48 = vector.extract_strided_slice %15 {offsets = [0, 16], sizes = [8, 8], strides = [1, 1]} : vector<8x96xbf16> to vector<8x8xbf16>
    %49 = vector.extract_strided_slice %15 {offsets = [0, 48], sizes = [8, 8], strides = [1, 1]} : vector<8x96xbf16> to vector<8x8xbf16>
    %50 = vector.extract_strided_slice %15 {offsets = [0, 80], sizes = [8, 8], strides = [1, 1]} : vector<8x96xbf16> to vector<8x8xbf16>
    "tpu.trace_start"() <{level = 10 : i32, message = "qd,kd->qk"}> : () -> ()
    %cst_16 = arith.constant dense<0.000000e+00> : vector<8x8xf32>
    %51 = tpu.matmul %48, %49, %cst_16 {dimension_numbers = #tpu.dot_dimension_numbers<[1], [1], [0], [0], [0, 0, 1, 0], [], []>} : vector<8x8xbf16>, vector<8x8xbf16>, vector<8x8xf32> -> vector<8x8xf32>
    "tpu.trace_stop"() : () -> ()
    %cst_17 = arith.constant dense<0xFF800000> : vector<8xf32>
    %52 = vector.multi_reduction <maximumf>, %51, %cst_17 [1] : vector<8x8xf32> to vector<8xf32>
    %53 = vector.shape_cast %52 : vector<8xf32> to vector<8x1xf32>
    %54 = vector.broadcast %53 : vector<8x1xf32> to vector<8x8xf32>
    %55 = arith.subf %51, %54 : vector<8x8xf32>
    %56 = math.exp %55 : vector<8x8xf32>
    %cst_18 = arith.constant dense<0.000000e+00> : vector<8xf32>
    %57 = vector.multi_reduction <add>, %56, %cst_18 [1] : vector<8x8xf32> to vector<8xf32>
    %58 = vector.shape_cast %57 : vector<8xf32> to vector<8x1xf32>
    %59 = tpu.reciprocal %58 {approx = true} : vector<8x1xf32> -> vector<8x1xf32>
    %60 = vector.broadcast %59 : vector<8x1xf32> to vector<8x8xf32>
    %61 = arith.mulf %56, %60 : vector<8x8xf32>
    %62 = arith.truncf %61 : vector<8x8xf32> to vector<8x8xbf16>
    %cst_19 = arith.constant dense<0.000000e+00> : vector<8x8xf32>
    %63 = tpu.matmul %62, %50, %cst_19 {dimension_numbers = #tpu.dot_dimension_numbers<[1], [0], [0], [1], [0, 0, 1, 1], [], []>} : vector<8x8xbf16>, vector<8x8xbf16>, vector<8x8xf32> -> vector<8x8xf32>
    %64 = vector.extract_strided_slice %15 {offsets = [0, 24], sizes = [8, 8], strides = [1, 1]} : vector<8x96xbf16> to vector<8x8xbf16>
    %65 = vector.extract_strided_slice %15 {offsets = [0, 56], sizes = [8, 8], strides = [1, 1]} : vector<8x96xbf16> to vector<8x8xbf16>
    %66 = vector.extract_strided_slice %15 {offsets = [0, 88], sizes = [8, 8], strides = [1, 1]} : vector<8x96xbf16> to vector<8x8xbf16>
    "tpu.trace_start"() <{level = 10 : i32, message = "qd,kd->qk"}> : () -> ()
    %cst_20 = arith.constant dense<0.000000e+00> : vector<8x8xf32>
    %67 = tpu.matmul %64, %65, %cst_20 {dimension_numbers = #tpu.dot_dimension_numbers<[1], [1], [0], [0], [0, 0, 1, 0], [], []>} : vector<8x8xbf16>, vector<8x8xbf16>, vector<8x8xf32> -> vector<8x8xf32>
    "tpu.trace_stop"() : () -> ()
    %cst_21 = arith.constant dense<0xFF800000> : vector<8xf32>
    %68 = vector.multi_reduction <maximumf>, %67, %cst_21 [1] : vector<8x8xf32> to vector<8xf32>
    %69 = vector.shape_cast %68 : vector<8xf32> to vector<8x1xf32>
    %70 = vector.broadcast %69 : vector<8x1xf32> to vector<8x8xf32>
    %71 = arith.subf %67, %70 : vector<8x8xf32>
    %72 = math.exp %71 : vector<8x8xf32>
    %cst_22 = arith.constant dense<0.000000e+00> : vector<8xf32>
    %73 = vector.multi_reduction <add>, %72, %cst_22 [1] : vector<8x8xf32> to vector<8xf32>
    %74 = vector.shape_cast %73 : vector<8xf32> to vector<8x1xf32>
    %75 = tpu.reciprocal %74 {approx = true} : vector<8x1xf32> -> vector<8x1xf32>
    %76 = vector.broadcast %75 : vector<8x1xf32> to vector<8x8xf32>
    %77 = arith.mulf %72, %76 : vector<8x8xf32>
    %78 = arith.truncf %77 : vector<8x8xf32> to vector<8x8xbf16>
    %cst_23 = arith.constant dense<0.000000e+00> : vector<8x8xf32>
    %79 = tpu.matmul %78, %66, %cst_23 {dimension_numbers = #tpu.dot_dimension_numbers<[1], [0], [0], [1], [0, 0, 1, 1], [], []>} : vector<8x8xbf16>, vector<8x8xbf16>, vector<8x8xf32> -> vector<8x8xf32>
    %80 = tpu.concatenate %31, %47, %63, %79 in 1 : vector<8x8xf32>, vector<8x8xf32>, vector<8x8xf32>, vector<8x8xf32> -> vector<8x32xf32>
    %81 = arith.truncf %80 : vector<8x32xf32> to vector<8x32xbf16>
    %c0_24 = arith.constant 0 : index
    %c0_25 = arith.constant 0 : index
    %82 = vector.load %arg4[%c0_24, %c0_25] : memref<32x32xbf16, #tpu.memory_space<vmem>>, vector<32x32xbf16>
    %cst_26 = arith.constant dense<0.000000e+00> : vector<8x32xf32>
    %83 = tpu.matmul %81, %82, %cst_26 {dimension_numbers = #tpu.dot_dimension_numbers<[1], [0], [0], [1], [0, 0, 1, 1], [], []>} : vector<8x32xbf16>, vector<32x32xbf16>, vector<8x32xf32> -> vector<8x32xf32>
    %84 = vector.broadcast %3 : vector<1x32xf32> to vector<8x32xf32>
    %85 = arith.addf %83, %84 : vector<8x32xf32>
    %cst_27 = arith.constant dense<0.000000e+00> : vector<8xf32>
    %86 = vector.multi_reduction <add>, %85, %cst_27 [1] : vector<8x32xf32> to vector<8xf32>
    %87 = vector.shape_cast %86 : vector<8xf32> to vector<8x1xf32>
    %cst_28 = arith.constant 3.200000e+01 : f32
    %88 = vector.broadcast %cst_28 : f32 to vector<8x1xf32>
    %89 = arith.divf %87, %88 : vector<8x1xf32>
    %90 = vector.broadcast %89 : vector<8x1xf32> to vector<8x32xf32>
    %91 = arith.subf %85, %90 : vector<8x32xf32>
    %92 = arith.mulf %91, %91 : vector<8x32xf32>
    %cst_29 = arith.constant dense<0.000000e+00> : vector<8xf32>
    %93 = vector.multi_reduction <add>, %92, %cst_29 [1] : vector<8x32xf32> to vector<8xf32>
    %94 = vector.shape_cast %93 : vector<8xf32> to vector<8x1xf32>
    %cst_30 = arith.constant 3.200000e+01 : f32
    %95 = vector.broadcast %cst_30 : f32 to vector<8x1xf32>
    %96 = arith.divf %94, %95 : vector<8x1xf32>
    %cst_31 = arith.constant 9.99999974E-6 : f32
    %97 = vector.broadcast %cst_31 : f32 to vector<8x1xf32>
    %98 = arith.addf %96, %97 : vector<8x1xf32>
    %99 = math.rsqrt %98 : vector<8x1xf32>
    %100 = vector.broadcast %99 : vector<8x1xf32> to vector<8x32xf32>
    %101 = arith.mulf %91, %100 : vector<8x32xf32>
    %102 = vector.broadcast %4 : vector<1x32xf32> to vector<8x32xf32>
    %103 = arith.mulf %101, %102 : vector<8x32xf32>
    %104 = vector.broadcast %5 : vector<1x32xf32> to vector<8x32xf32>
    %105 = arith.addf %103, %104 : vector<8x32xf32>
    %106 = arith.addf %1, %105 : vector<8x32xf32>
    %107 = arith.truncf %106 : vector<8x32xf32> to vector<8x32xbf16>
    %c0_32 = arith.constant 0 : index
    %c0_33 = arith.constant 0 : index
    %108 = vector.load %arg5[%c0_32, %c0_33] : memref<32x32xbf16, #tpu.memory_space<vmem>>, vector<32x32xbf16>
    %cst_34 = arith.constant dense<0.000000e+00> : vector<8x32xf32>
    %109 = tpu.matmul %107, %108, %cst_34 {dimension_numbers = #tpu.dot_dimension_numbers<[1], [0], [0], [1], [0, 0, 1, 1], [], []>} : vector<8x32xbf16>, vector<32x32xbf16>, vector<8x32xf32> -> vector<8x32xf32>
    %c0_35 = arith.constant 0 : index
    %c0_36 = arith.constant 0 : index
    %110 = vector.load %arg6[%c0_35, %c0_36] : memref<1x32xf32, #tpu.memory_space<vmem>>, vector<1x32xf32>
    %111 = vector.broadcast %110 : vector<1x32xf32> to vector<8x32xf32>
    %112 = arith.addf %109, %111 : vector<8x32xf32>
    %cst_37 = arith.constant 0.000000e+00 : f32
    %113 = vector.broadcast %cst_37 : f32 to vector<8x32xf32>
    %114 = arith.maximumf %112, %113 : vector<8x32xf32>
    %115 = arith.truncf %114 : vector<8x32xf32> to vector<8x32xbf16>
    %c0_38 = arith.constant 0 : index
    %c0_39 = arith.constant 0 : index
    %116 = vector.load %arg7[%c0_38, %c0_39] : memref<32x32xbf16, #tpu.memory_space<vmem>>, vector<32x32xbf16>
    %cst_40 = arith.constant dense<0.000000e+00> : vector<8x32xf32>
    %117 = tpu.matmul %115, %116, %cst_40 {dimension_numbers = #tpu.dot_dimension_numbers<[1], [0], [0], [1], [0, 0, 1, 1], [], []>} : vector<8x32xbf16>, vector<32x32xbf16>, vector<8x32xf32> -> vector<8x32xf32>
    %118 = vector.broadcast %6 : vector<1x32xf32> to vector<8x32xf32>
    %119 = arith.addf %117, %118 : vector<8x32xf32>
    %cst_41 = arith.constant dense<0.000000e+00> : vector<8xf32>
    %120 = vector.multi_reduction <add>, %119, %cst_41 [1] : vector<8x32xf32> to vector<8xf32>
    %121 = vector.shape_cast %120 : vector<8xf32> to vector<8x1xf32>
    %cst_42 = arith.constant 3.200000e+01 : f32
    %122 = vector.broadcast %cst_42 : f32 to vector<8x1xf32>
    %123 = arith.divf %121, %122 : vector<8x1xf32>
    %124 = vector.broadcast %123 : vector<8x1xf32> to vector<8x32xf32>
    %125 = arith.subf %119, %124 : vector<8x32xf32>
    %126 = arith.mulf %125, %125 : vector<8x32xf32>
    %cst_43 = arith.constant dense<0.000000e+00> : vector<8xf32>
    %127 = vector.multi_reduction <add>, %126, %cst_43 [1] : vector<8x32xf32> to vector<8xf32>
    %128 = vector.shape_cast %127 : vector<8xf32> to vector<8x1xf32>
    %cst_44 = arith.constant 3.200000e+01 : f32
    %129 = vector.broadcast %cst_44 : f32 to vector<8x1xf32>
    %130 = arith.divf %128, %129 : vector<8x1xf32>
    %cst_45 = arith.constant 9.99999974E-6 : f32
    %131 = vector.broadcast %cst_45 : f32 to vector<8x1xf32>
    %132 = arith.addf %130, %131 : vector<8x1xf32>
    %133 = math.rsqrt %132 : vector<8x1xf32>
    %134 = vector.broadcast %133 : vector<8x1xf32> to vector<8x32xf32>
    %135 = arith.mulf %125, %134 : vector<8x32xf32>
    %136 = vector.broadcast %7 : vector<1x32xf32> to vector<8x32xf32>
    %137 = arith.mulf %135, %136 : vector<8x32xf32>
    %138 = vector.broadcast %8 : vector<1x32xf32> to vector<8x32xf32>
    %139 = arith.addf %137, %138 : vector<8x32xf32>
    %140 = arith.addf %106, %139 : vector<8x32xf32>
    %141 = vector.shape_cast %140 : vector<8x32xf32> to vector<1x8x32xf32>
    %c0_46 = arith.constant 0 : index
    %c0_47 = arith.constant 0 : index
    %c0_48 = arith.constant 0 : index
    %142 = vector.load %arg9[%c0_46, %c0_47, %c0_48] : memref<1x8x32xf32, #tpu.memory_space<vmem>>, vector<1x8x32xf32>
    tpu.vector_store %arg9[%c0_46, %c0_47, %c0_48], %141 {strides = array<i32>} : memref<1x8x32xf32, #tpu.memory_space<vmem>>, vector<1x8x32xf32>,
    return
  }
  func.func @transform_0(%arg0: i32) -> (i32, i32, i32) {
    %c0_i32 = arith.constant 0 : i32
    %c0_i32_0 = arith.constant 0 : i32
    %c0_i32_1 = arith.constant 0 : i32
    return %arg0, %c0_i32, %c0_i32_0 : i32, i32, i32
  }
  func.func @transform_1(%arg0: i32) -> (i32, i32) {
    %c0_i32 = arith.constant 0 : i32
    %c0_i32_0 = arith.constant 0 : i32
    %c0_i32_1 = arith.constant 0 : i32
    return %c0_i32, %c0_i32_0 : i32, i32
  }
  func.func @transform_2(%arg0: i32) -> (i32, i32) {
    %c0_i32 = arith.constant 0 : i32
    %c0_i32_0 = arith.constant 0 : i32
    %c0_i32_1 = arith.constant 0 : i32
    return %c0_i32, %c0_i32_0 : i32, i32
  }
  func.func @transform_3(%arg0: i32) -> (i32, i32) {
    %c0_i32 = arith.constant 0 : i32
    %c0_i32_0 = arith.constant 0 : i32
    %c0_i32_1 = arith.constant 0 : i32
    return %c0_i32, %c0_i32_0 : i32, i32
  }
  func.func @transform_4(%arg0: i32) -> (i32, i32) {
    %c0_i32 = arith.constant 0 : i32
    %c0_i32_0 = arith.constant 0 : i32
    %c0_i32_1 = arith.constant 0 : i32
    return %c0_i32, %c0_i32_0 : i32, i32
  }
  func.func @transform_5(%arg0: i32) -> (i32, i32) {
    %c0_i32 = arith.constant 0 : i32
    %c0_i32_0 = arith.constant 0 : i32
    %c0_i32_1 = arith.constant 0 : i32
    return %c0_i32, %c0_i32_0 : i32, i32
  }
  func.func @transform_6(%arg0: i32) -> (i32, i32) {
    %c0_i32 = arith.constant 0 : i32
    %c0_i32_0 = arith.constant 0 : i32
    %c0_i32_1 = arith.constant 0 : i32
    return %c0_i32, %c0_i32_0 : i32, i32
  }
  func.func @transform_7(%arg0: i32) -> (i32, i32) {
    %c0_i32 = arith.constant 0 : i32
    %c0_i32_0 = arith.constant 0 : i32
    %c0_i32_1 = arith.constant 0 : i32
    return %c0_i32, %c0_i32_0 : i32, i32
  }
  func.func @transform_8(%arg0: i32) -> (i32, i32, i32) {
    %c0_i32 = arith.constant 0 : i32
    %c0_i32_0 = arith.constant 0 : i32
    %c0_i32_1 = arith.constant 0 : i32
    return %arg0, %c0_i32, %c0_i32_0 : i32, i32, i32
  }
}

</mosaic_0001>

<llo_original>
// kernel: tpu_custom_call.1
$region0: #{tpu_custom_call.1}
  #allocation0 [shape = 'u32[]', space=smem, size = 0x4, offset = 0x4, fixed_abs, tag = 'smem constant byte address 0x4 - core index']
  #allocation1 [shape = 'u32[144,128]{1,0:T(1,128)}', space=vmem, size = 0x12000, scoped, tag = 'internal scratch']
  %s0 = inlined_call_operand.hbm [shape: f32[2,8,32], index: 0, kind: input, shape index: {}]
  %s1 = inlined_call_operand.hbm [shape: bf16[32,96], index: 1, kind: input, shape index: {}]
  %s2 = inlined_call_operand.vmem [shape: f32[1,96], index: 2, kind: input, shape index: {}]
  %s3 = inlined_call_operand.hbm [shape: bf16[32,32], index: 3, kind: input, shape index: {}]
  %s4 = inlined_call_operand.hbm [shape: bf16[32,32], index: 4, kind: input, shape index: {}]
  %s5 = inlined_call_operand.vmem [shape: f32[1,32], index: 5, kind: input, shape index: {}]
  %s6 = inlined_call_operand.vmem [shape: bf16[32,32], index: 6, kind: input, shape index: {}]
  %s7 = inlined_call_operand.vmem [shape: f32[6,32], index: 7, kind: input, shape index: {}]
  %s8 = inlined_call_operand.hbm [shape: f32[2,8,32], index: 8, kind: output, shape index: {}]
  %s9 = sld [smem:[#allocation0]]
  $region81: #{tpu_custom_call.1} parent=0
    _
  %s11 = ssub.s32 1, %s9
  %s12 = scalar_select 0, %s11, %s9
  $region1: #{tpu_custom_call.1} parent=0
    #allocation2 [shape = 'u8[8192]{0}', space=vmem, size = 0x2000, scoped, tag = 'input window, operand 0']
    #allocation3 [shape = 's32[2]{0}', space=sflag, size = 0x8, scoped, tag = 'scoped memory for tpu_custom_call.1']
    #allocation4 [shape = 's32[2]{0}', space=sflag, size = 0x8, scoped, tag = 'scoped memory for tpu_custom_call.1']
    #allocation5 [shape = 'u8[8192]{0}', space=vmem, size = 0x2000, scoped, tag = 'input window, operand 1, single buffered']
    #allocation6 [shape = 's32[1]{0}', space=sflag, size = 0x4, scoped, tag = 'scoped memory for tpu_custom_call.1']
    #allocation7 [shape = 'u8[8192]{0}', space=vmem, size = 0x2000, scoped, tag = 'input window, operand 3, single buffered']
    #allocation8 [shape = 'u8[8192]{0}', space=vmem, size = 0x2000, scoped, tag = 'input window, operand 4, single buffered']
    #allocation9 [shape = 's32[1]{0}', space=sflag, size = 0x4, scoped, tag = 'scoped memory for tpu_custom_call.1']
    #allocation10 [shape = 'u8[8192]{0}', space=vmem, size = 0x2000, scoped, tag = 'output window, operand 0']
    %13 = vsyncpa [#allocation3], 0
    %s14 = scalar_lea.sflag [#allocation3], 1
    %15 = vsyncpa %s14, 0
    %16 = vsyncpa [#allocation6], 0
    %17 = vsyncpa [#allocation9], 0
    %18 = vsyncpa [#allocation4], 0
    %s19 = scalar_lea.sflag [#allocation4], 1
    %20 = vsyncpa %s19, 0
    loop: start=0, step=1, limit=4
    $region2: #{tpu_custom_call.1} parent=1 // loop_pre_header
      _
    $region3: #{tpu_custom_call.1} parent=1 // loop_header
      %s22 = sphi 0, %s26
      %p23 = scmp.ge.s32.totalorder %s22, 4
      %s32 = sphi 0, %s34
      %s35 = sphi 0, %s32
      %s36 = sphi 0, %s35
      %s52 = sphi 0, %s36
      %s56 = sphi 0, %s56
      %s58 = sphi 0, %s56
      %s59 = sphi 0, %s58
      %s73 = sphi 0, %s59
      %s77 = sphi 0, %s77
      %s79 = sphi 0, %s77
      %s80 = sphi 0, %s79
      %s94 = sphi 0, %s80
      %s98 = sphi 0, %s98
      %s100 = sphi 0, %s98
      %s101 = sphi 0, %s100
      %s115 = sphi 0, %s101
      %s119 = sphi 0, %s119
      %s121 = sphi 0, %s119
      %s122 = sphi 0, %s121
      %s136 = sphi 0, %s122
      %s140 = sphi 0, %s140
      %s142 = sphi 0, %s140
      %s143 = sphi 0, %s142
      %s157 = sphi 0, %s143
      %s161 = sphi 0, %s161
      %s163 = sphi 0, %s161
      %s164 = sphi 0, %s163
      %s178 = sphi 0, %s164
      %s182 = sphi 0, %s182
      %s184 = sphi 0, %s182
      %s185 = sphi 0, %s184
      %s199 = sphi 0, %s185
      %s205 = sphi 0, %s207
      %s208 = sphi 0, %s205
      %s209 = sphi 0, %s208
      %s225 = sphi 0, %s209
    $region4: #{tpu_custom_call.1} parent=1 // loop_header_branch
      %25 = sbr.rel (%p23) target = $region8
    $region5: #{tpu_custom_call.1} parent=1 // loop_body
      %s27 = ssub.s32 %s22, 1
      %s28 = ssub.s32 %s22, 2
      %s29 = sadd.s32 %s22, 1
      %s30 = ssub.s32 %s22, %s29
      %p31 = scmp.eq.s32.totalorder %s30, 0
      %s33 = sadd.s32 %s32, 1
      %s34 = scalar_select %p31, %s32, %s33
      %p37 = pneg %p31
      %p38 = scmp.eq.s32.totalorder %s22, 1
      %p39 = por %p37, %p38
      %p40 = scmp.ne.s32.totalorder %s32, %s35
      %p41 = scmp.eq.s32.totalorder %s22, 0
      %p42 = por %p40, %p41
      %p43 = scmp.ne.s32.totalorder %s32, %s35
      %p44 = scmp.eq.s32.totalorder %s27, 1
      %p45 = por %p43, %p44
      %p46 = scmp.ne.s32.totalorder %s35, %s36
      %p47 = scmp.eq.s32.totalorder %s27, 0
      %p48 = por %p46, %p47
      %p49 = scmp.ne.s32.totalorder %s35, %s36
      %p50 = scmp.eq.s32.totalorder %s28, 1
      %p51 = por %p49, %p50
      %p53 = scmp.ne.s32.totalorder %s36, %s52
      %p54 = scmp.eq.s32.totalorder %s28, 0
      %p55 = por %p53, %p54
      %s57 = sadd.s32 %s56, 1
      %p60 = scmp.eq.s32.totalorder %s22, 1
      %p61 = scmp.ne.s32.totalorder %s56, %s58
      %p62 = scmp.eq.s32.totalorder %s22, 0
      %p63 = por %p61, %p62
      %p64 = scmp.ne.s32.totalorder %s56, %s58
      %p65 = scmp.eq.s32.totalorder %s27, 1
      %p66 = por %p64, %p65
      %p67 = scmp.ne.s32.totalorder %s58, %s59
      %p68 = scmp.eq.s32.totalorder %s27, 0
      %p69 = por %p67, %p68
      %p70 = scmp.ne.s32.totalorder %s58, %s59
      %p71 = scmp.eq.s32.totalorder %s28, 1
      %p72 = por %p70, %p71
      %p74 = scmp.ne.s32.totalorder %s59, %s73
      %p75 = scmp.eq.s32.totalorder %s28, 0
      %p76 = por %p74, %p75
      %s78 = sadd.s32 %s77, 1
      %p81 = scmp.eq.s32.totalorder %s22, 1
      %p82 = scmp.ne.s32.totalorder %s77, %s79
      %p83 = scmp.eq.s32.totalorder %s22, 0
      %p84 = por %p82, %p83
      %p85 = scmp.ne.s32.totalorder %s77, %s79
      %p86 = scmp.eq.s32.totalorder %s27, 1
      %p87 = por %p85, %p86
      %p88 = scmp.ne.s32.totalorder %s79, %s80
      %p89 = scmp.eq.s32.totalorder %s27, 0
      %p90 = por %p88, %p89
      %p91 = scmp.ne.s32.totalorder %s79, %s80
      %p92 = scmp.eq.s32.totalorder %s28, 1
      %p93 = por %p91, %p92
      %p95 = scmp.ne.s32.totalorder %s80, %s94
      %p96 = scmp.eq.s32.totalorder %s28, 0
      %p97 = por %p95, %p96
      %s99 = sadd.s32 %s98, 1
      %p102 = scmp.eq.s32.totalorder %s22, 1
      %p103 = scmp.ne.s32.totalorder %s98, %s100
      %p104 = scmp.eq.s32.totalorder %s22, 0
      %p105 = por %p103, %p104
      %p106 = scmp.ne.s32.totalorder %s98, %s100
      %p107 = scmp.eq.s32.totalorder %s27, 1
      %p108 = por %p106, %p107
      %p109 = scmp.ne.s32.totalorder %s100, %s101
      %p110 = scmp.eq.s32.totalorder %s27, 0
      %p111 = por %p109, %p110
      %p112 = scmp.ne.s32.totalorder %s100, %s101
      %p113 = scmp.eq.s32.totalorder %s28, 1
      %p114 = por %p112, %p113
      %p116 = scmp.ne.s32.totalorder %s101, %s115
      %p117 = scmp.eq.s32.totalorder %s28, 0
      %p118 = por %p116, %p117
      %s120 = sadd.s32 %s119, 1
      %p123 = scmp.eq.s32.totalorder %s22, 1
      %p124 = scmp.ne.s32.totalorder %s119, %s121
      %p125 = scmp.eq.s32.totalorder %s22, 0
      %p126 = por %p124, %p125
      %p127 = scmp.ne.s32.totalorder %s119, %s121
      %p128 = scmp.eq.s32.totalorder %s27, 1
      %p129 = por %p127, %p128
      %p130 = scmp.ne.s32.totalorder %s121, %s122
      %p131 = scmp.eq.s32.totalorder %s27, 0
      %p132 = por %p130, %p131
      %p133 = scmp.ne.s32.totalorder %s121, %s122
      %p134 = scmp.eq.s32.totalorder %s28, 1
      %p135 = por %p133, %p134
      %p137 = scmp.ne.s32.totalorder %s122, %s136
      %p138 = scmp.eq.s32.totalorder %s28, 0
      %p139 = por %p137, %p138
      %s141 = sadd.s32 %s140, 1
      %p144 = scmp.eq.s32.totalorder %s22, 1
      %p145 = scmp.ne.s32.totalorder %s140, %s142
      %p146 = scmp.eq.s32.totalorder %s22, 0
      %p147 = por %p145, %p146
      %p148 = scmp.ne.s32.totalorder %s140, %s142
      %p149 = scmp.eq.s32.totalorder %s27, 1
      %p150 = por %p148, %p149
      %p151 = scmp.ne.s32.totalorder %s142, %s143
      %p152 = scmp.eq.s32.totalorder %s27, 0
      %p153 = por %p151, %p152
      %p154 = scmp.ne.s32.totalorder %s142, %s143
      %p155 = scmp.eq.s32.totalorder %s28, 1
      %p156 = por %p154, %p155
      %p158 = scmp.ne.s32.totalorder %s143, %s157
      %p159 = scmp.eq.s32.totalorder %s28, 0
      %p160 = por %p158, %p159
      %s162 = sadd.s32 %s161, 1
      %p165 = scmp.eq.s32.totalorder %s22, 1
      %p166 = scmp.ne.s32.totalorder %s161, %s163
      %p167 = scmp.eq.s32.totalorder %s22, 0
      %p168 = por %p166, %p167
      %p169 = scmp.ne.s32.totalorder %s161, %s163
      %p170 = scmp.eq.s32.totalorder %s27, 1
      %p171 = por %p169, %p170
      %p172 = scmp.ne.s32.totalorder %s163, %s164
      %p173 = scmp.eq.s32.totalorder %s27, 0
      %p174 = por %p172, %p173
      %p175 = scmp.ne.s32.totalorder %s163, %s164
      %p176 = scmp.eq.s32.totalorder %s28, 1
      %p177 = por %p175, %p176
      %p179 = scmp.ne.s32.totalorder %s164, %s178
      %p180 = scmp.eq.s32.totalorder %s28, 0
      %p181 = por %p179, %p180
      %s183 = sadd.s32 %s182, 1
      %p186 = scmp.eq.s32.totalorder %s22, 1
      %p187 = scmp.ne.s32.totalorder %s182, %s184
      %p188 = scmp.eq.s32.totalorder %s22, 0
      %p189 = por %p187, %p188
      %p190 = scmp.ne.s32.totalorder %s182, %s184
      %p191 = scmp.eq.s32.totalorder %s27, 1
      %p192 = por %p190, %p191
      %p193 = scmp.ne.s32.totalorder %s184, %s185
      %p194 = scmp.eq.s32.totalorder %s27, 0
      %p195 = por %p193, %p194
      %p196 = scmp.ne.s32.totalorder %s184, %s185
      %p197 = scmp.eq.s32.totalorder %s28, 1
      %p198 = por %p196, %p197
      %p200 = scmp.ne.s32.totalorder %s185, %s199
      %p201 = scmp.eq.s32.totalorder %s28, 0
      %p202 = por %p200, %p201
      %s203 = ssub.s32 %s22, %s29
      %p204 = scmp.eq.s32.totalorder %s203, 0
      %s206 = sadd.s32 %s205, 1
      %s207 = scalar_select %p204, %s205, %s206
      %p210 = pneg %p204
      %p211 = scmp.eq.s32.totalorder %s22, 1
      %p212 = por %p210, %p211
      %p213 = scmp.ne.s32.totalorder %s205, %s208
      %p214 = scmp.eq.s32.totalorder %s22, 0
      %p215 = por %p213, %p214
      %p216 = scmp.ne.s32.totalorder %s205, %s208
      %p217 = scmp.eq.s32.totalorder %s27, 1
      %p218 = por %p216, %p217
      %p219 = scmp.ne.s32.totalorder %s208, %s209
      %p220 = scmp.eq.s32.totalorder %s27, 0
      %p221 = por %p219, %p220
      %p222 = scmp.ne.s32.totalorder %s208, %s209
      %p223 = scmp.eq.s32.totalorder %s28, 1
      %p224 = por %p222, %p223
      %p226 = scmp.ne.s32.totalorder %s209, %s225
      %p227 = scmp.eq.s32.totalorder %s28, 0
      %p228 = por %p226, %p227
      %p229 = scmp.le.s32.totalorder 1, %s22
      %p230 = scmp.lt.s32.totalorder %s22, 3
      %p231 = pnand %p229, %p230
      %p232 = pneg %p231
      // Predicated region
      $region9: #{tpu_custom_call.1} parent=5 // pred_check
        _
      $region10: #{tpu_custom_call.1} parent=5 // pred_check_branch
        %234 = sbr.rel (%p231) target = $region12
      $region11: #{tpu_custom_call.1} parent=5 // pred_region
        %s235 = ssub.s32 %s22, 1
        // Predicated region
        $region13: #{tpu_custom_call.1} parent=11 // pred_check
          %p236 = pneg %p69
        $region14: #{tpu_custom_call.1} parent=11 // pred_check_branch
          %238 = sbr.rel (%p236) target = $region16
        $region15: #{tpu_custom_call.1} parent=11 // pred_region
          %s240 = ssub.s32 256, 256
          %241 = vsyncadd [#allocation6], %s240
          %s242 = sshll.u32 [#allocation5], 4
          %s243 = int_to_ptr.vmem [resolvable:$true] %s242
          %248 = dma.hbm_to_vmem [thread:$0]  %s1, 256, %s243, [#allocation6], 64, 64, 4
        $region16: #{tpu_custom_call.1} parent=11 // pred_fallthru
          _
        // Predicated region
        $region17: #{tpu_custom_call.1} parent=11 // pred_check
          %p249 = pneg %p90
        $region18: #{tpu_custom_call.1} parent=11 // pred_check_branch
          %251 = sbr.rel (%p249) target = $region20
        $region19: #{tpu_custom_call.1} parent=11 // pred_region
          _
        $region20: #{tpu_custom_call.1} parent=11 // pred_fallthru
          _
        // Predicated region
        $region21: #{tpu_custom_call.1} parent=11 // pred_check
          %p252 = pneg %p111
        $region22: #{tpu_custom_call.1} parent=11 // pred_check_branch
          %254 = sbr.rel (%p252) target = $region24
        $region23: #{tpu_custom_call.1} parent=11 // pred_region
          %s256 = ssub.s32 256, 256
          %257 = vsyncadd [#allocation6], %s256
          %s258 = sshll.u32 [#allocation7], 4
          %s259 = int_to_ptr.vmem [resolvable:$true] %s258
          %264 = dma.hbm_to_vmem [thread:$0]  %s3, 256, %s259, [#allocation6], 64, 64, 4
        $region24: #{tpu_custom_call.1} parent=11 // pred_fallthru
          _
        // Predicated region
        $region25: #{tpu_custom_call.1} parent=11 // pred_check
          %p265 = pneg %p132
        $region26: #{tpu_custom_call.1} parent=11 // pred_check_branch
          %267 = sbr.rel (%p265) target = $region28
        $region27: #{tpu_custom_call.1} parent=11 // pred_region
          %s269 = ssub.s32 256, 256
          %270 = vsyncadd [#allocation9], %s269
          %s271 = sshll.u32 [#allocation8], 4
          %s272 = int_to_ptr.vmem [resolvable:$true] %s271
          %277 = dma.hbm_to_vmem [thread:$0]  %s4, 256, %s272, [#allocation9], 64, 64, 4
        $region28: #{tpu_custom_call.1} parent=11 // pred_fallthru
          _
        // Predicated region
        $region29: #{tpu_custom_call.1} parent=11 // pred_check
          %p278 = pneg %p153
        $region30: #{tpu_custom_call.1} parent=11 // pred_check_branch
          %280 = sbr.rel (%p278) target = $region32
        $region31: #{tpu_custom_call.1} parent=11 // pred_region
          _
        $region32: #{tpu_custom_call.1} parent=11 // pred_fallthru
          _
        // Predicated region
        $region33: #{tpu_custom_call.1} parent=11 // pred_check
          %p281 = pneg %p174
        $region34: #{tpu_custom_call.1} parent=11 // pred_check_branch
          %283 = sbr.rel (%p281) target = $region36
        $region35: #{tpu_custom_call.1} parent=11 // pred_region
          _
        $region36: #{tpu_custom_call.1} parent=11 // pred_fallthru
          _
        // Predicated region
        $region37: #{tpu_custom_call.1} parent=11 // pred_check
          %p284 = pneg %p195
        $region38: #{tpu_custom_call.1} parent=11 // pred_check_branch
          %286 = sbr.rel (%p284) target = $region40
        $region39: #{tpu_custom_call.1} parent=11 // pred_region
          _
        $region40: #{tpu_custom_call.1} parent=11 // pred_fallthru
          _
      $region12: #{tpu_custom_call.1} parent=5 // pred_fallthru
        _
      %p287 = scmp.lt.s32.totalorder %s22, 2
      // Predicated region
      $region41: #{tpu_custom_call.1} parent=5 // pred_check
        %p288 = pneg %p287
      $region42: #{tpu_custom_call.1} parent=5 // pred_check_branch
        %290 = sbr.rel (%p288) target = $region44
      $region43: #{tpu_custom_call.1} parent=5 // pred_region
        // Predicated region
        $region45: #{tpu_custom_call.1} parent=43 // pred_check
          %p291 = pneg %p42
        $region46: #{tpu_custom_call.1} parent=43 // pred_check_branch
          %293 = sbr.rel (%p291) target = $region48
        $region47: #{tpu_custom_call.1} parent=43 // pred_region
          %s294 = sand.u32 %s32, 1
          %s295 = scalar_lea.sflag [#allocation3], %s294
          %s296 = sand.u32 %s32, 1
          %s297 = smul.addr %s296, 8
          %s298 = scalar_lea.vmem [#allocation2], %s297
          %s300 = ssub.s32 128, 128
          %301 = vsyncadd %s295, %s300
          %s302 = smul.addr %s22, 128
          %s303 = scalar_lea.hbm %s0, %s302
          %s305 = sshll.u32 %s298, 4
          %s306 = int_to_ptr.vmem [resolvable:$true] %s305
          %308 = dma.hbm_to_vmem [thread:$0]  %s303, 128, %s306, %s295
        $region48: #{tpu_custom_call.1} parent=43 // pred_fallthru
          _
      $region44: #{tpu_custom_call.1} parent=5 // pred_fallthru
        _
      %p309 = scmp.le.s32.totalorder 1, %s22
      %p310 = scmp.lt.s32.totalorder %s22, 3
      %p311 = pnand %p309, %p310
      %p312 = pneg %p311
      // Predicated region
      $region49: #{tpu_custom_call.1} parent=5 // pred_check
        _
      $region50: #{tpu_custom_call.1} parent=5 // pred_check_branch
        %314 = sbr.rel (%p311) target = $region52
      $region51: #{tpu_custom_call.1} parent=5 // pred_region
        %s315 = ssub.s32 %s22, 1
        %s316 = sand.u32 %s35, 1
        %s317 = scalar_lea.sflag [#allocation3], %s316
        %s318 = sand.u32 %s35, 1
        %s319 = smul.addr %s318, 8
        %s320 = scalar_lea.vmem [#allocation2], %s319
        // Predicated region
        $region53: #{tpu_custom_call.1} parent=51 // pred_check
          %p321 = pneg %p48
        $region54: #{tpu_custom_call.1} parent=51 // pred_check_branch
          %323 = sbr.rel (%p321) target = $region56
        $region55: #{tpu_custom_call.1} parent=51 // pred_region
          %324 = dma.done %s317, 128
        $region56: #{tpu_custom_call.1} parent=51 // pred_fallthru
          _
        // Predicated region
        $region57: #{tpu_custom_call.1} parent=51 // pred_check
          %p325 = pneg %p69
        $region58: #{tpu_custom_call.1} parent=51 // pred_check_branch
          %327 = sbr.rel (%p325) target = $region60
        $region59: #{tpu_custom_call.1} parent=51 // pred_region
          %328 = dma.done [#allocation6], 256
        $region60: #{tpu_custom_call.1} parent=51 // pred_fallthru
          _
        // Predicated region
        $region61: #{tpu_custom_call.1} parent=51 // pred_check
          %p329 = pneg %p111
        $region62: #{tpu_custom_call.1} parent=51 // pred_check_branch
          %331 = sbr.rel (%p329) target = $region64
        $region63: #{tpu_custom_call.1} parent=51 // pred_region
          %332 = dma.done [#allocation6], 256
        $region64: #{tpu_custom_call.1} parent=51 // pred_fallthru
          _
        // Predicated region
        $region65: #{tpu_custom_call.1} parent=51 // pred_check
          %p333 = pneg %p132
        $region66: #{tpu_custom_call.1} parent=51 // pred_check_branch
          %335 = sbr.rel (%p333) target = $region68
        $region67: #{tpu_custom_call.1} parent=51 // pred_region
          %336 = dma.done [#allocation9], 256
        $region68: #{tpu_custom_call.1} parent=51 // pred_fallthru
          _
        %s337 = sand.u32 %s35, 1
        %s338 = scalar_lea.sflag [#allocation3], %s337
        %s339 = sand.u32 %s35, 1
        %s340 = smul.addr %s339, 8
        %s341 = scalar_lea.vmem [#allocation2], %s340
        %p342 = pneg %p48
        %p343 = pneg %p45
        %p344 = pneg %p69
        %p345 = pneg %p66
        %p346 = pneg %p90
        %p347 = pneg %p87
        %p348 = pneg %p111
        %p349 = pneg %p108
        %p350 = pneg %p132
        %p351 = pneg %p129
        %p352 = pneg %p153
        %p353 = pneg %p150
        %p354 = pneg %p174
        %p355 = pneg %p171
        %p356 = pneg %p195
        %p357 = pneg %p192
        %p358 = pneg %p221
        %p359 = pneg %p218
        %s360 = sand.u32 %s208, 1
        %s361 = scalar_lea.sflag [#allocation4], %s360
        %s362 = sand.u32 %s208, 1
        %s363 = smul.addr %s362, 8
        %s364 = scalar_lea.vmem [#allocation10], %s363
        %v366 = vld [vmem:[%s320] sm:$0xff]
        %v367 = vld [vmem:[%s7] sm:$0x3f]
        %v368 = vpack.c.bf16 %v366, %v366
        %v369 = vld [vmem:[#allocation5] sm:$0xf]
        %v370 = vld [vmem:[#allocation5 + $0x4] sm:$0xf]
        %v371 = vld [vmem:[#allocation5 + $0x8] sm:$0xf]
        %v372 = vld [vmem:[#allocation5 + $0xc] sm:$0xf]
        %v373 = vld [vmem:[%s2] sm:$0x1]
        %v375 = vlaneseq
        %v376 = vshrl.u32 %v375, 7
        %v377 = vsub.s32 0, %v376
        %v378 = vrot.slane %v373, %v377
        %v384 = vunpack.c.l.b16 %v369
        %v385 = vunpack.c.l.b16 %v370
        %v386 = vunpack.c.l.b16 %v371
        %v387 = vunpack.c.l.b16 %v372
        %v388 = vpack.c.b16 %v385, %v384
        %v389 = vpack.c.b16 %v387, %v386
        %vm392 = vcmask 261120
        %v394 = vsel %vm392, %v368, 0
        %396 = vmatprep.subr.bf16.mxu0 0
        %397 = vmatpush1.bf16.msra.mxu0 %v388
        %398 = vmatprep.subr.bf16.mxu0 0
        %399 = vmatpush1.bf16.msra.mxu0 %v389
        %400 = vmatprep.subr.bf16.mxu0 0
        %401 = vmatpush1.bf16.msra.mxu0 0
        %402 = vmatprep.subr.bf16.mxu0 0
        %403 = vmatpush1.bf16.msra.mxu0 0
        %404 = vmatprep.subr.bf16.mxu0 0
        %405 = vmatpush1.bf16.msra.mxu0 0
        %406 = vmatprep.subr.bf16.mxu0 0
        %407 = vmatpush1.bf16.msra.mxu0 0
        %408 = vmatprep.subr.bf16.mxu0 0
        %409 = vmatpush1.bf16.msra.mxu0 0
        %410 = vmatprep.subr.bf16.mxu0 0
        %411 = vmatpush1.bf16.msra.mxu0 0
        %412 = vmatprep.subr.bf16.mxu0 0
        %413 = vmatpush1.bf16.msra.mxu0 0
        %414 = vmatprep.subr.bf16.mxu0 0
        %415 = vmatpush1.bf16.msra.mxu0 0
        %416 = vmatprep.subr.bf16.mxu0 0
        %417 = vmatpush1.bf16.msra.mxu0 0
        %418 = vmatprep.subr.bf16.mxu0 0
        %419 = vmatpush1.bf16.msra.mxu0 0
        %420 = vmatprep.subr.bf16.mxu0 0
        %421 = vmatpush1.bf16.msra.mxu0 0
        %422 = vmatprep.subr.bf16.mxu0 0
        %423 = vmatpush1.bf16.msra.mxu0 0
        %424 = vmatprep.subr.bf16.mxu0 0
        %425 = vmatpush1.bf16.msra.mxu0 0
        %426 = vmatprep.subr.bf16.mxu0 0
        %427 = vmatpush1.bf16.msra.mxu0 0
        %428 = vmatprep.mubr.bf16.mxu0 0
        %429 = vmatmul.mubr.bf16.gmra.mrb[0].mxu0 %v394
        %v430 = vpop.f32.mrb[0].mxu0
        %v431 = vadd.f32 %v378, %v430
        %v432 = vpop.f32.mrb[0].mxu0
        %v433 = vpop.f32.mrb[0].mxu0
        %v434 = vpop.f32.mrb[0].mxu0
        %435 = vdwg.mxu0
        %v436 = vpack.c.bf16 %v431, %v431
        %438 = vrot.lane.b32.xlu0 %v436, 96
        %v439 = vpop.permute.xlu0 %438
        %vm440 = vcmask 64512
        %v442 = vsel %vm440, %v436, 0
        %v445 = vsel %vm440, %v439, 0
        %447 = vmatprep.subr.bf16.mxu0 0
        %448 = vmatpush1.bf16.xpose.msra.mxu0 %v445
        %449 = vmatprep.subr.bf16.mxu0 0
        %450 = vmatpush1.bf16.xpose.msra.mxu0 0
        %451 = vmatprep.subr.bf16.mxu0 0
        %452 = vmatpush1.bf16.xpose.msra.mxu0 0
        %453 = vmatprep.subr.bf16.mxu0 0
        %454 = vmatpush1.bf16.xpose.msra.mxu0 0
        %455 = vmatprep.subr.bf16.mxu0 0
        %456 = vmatpush1.bf16.xpose.msra.mxu0 0
        %457 = vmatprep.subr.bf16.mxu0 0
        %458 = vmatpush1.bf16.xpose.msra.mxu0 0
        %459 = vmatprep.subr.bf16.mxu0 0
        %460 = vmatpush1.bf16.xpose.msra.mxu0 0
        %461 = vmatprep.subr.bf16.mxu0 0
        %462 = vmatpush1.bf16.xpose.msra.mxu0 0
        %463 = vmatprep.subr.bf16.mxu0 0
        %464 = vmatpush1.bf16.xpose.msra.mxu0 0
        %465 = vmatprep.subr.bf16.mxu0 0
        %466 = vmatpush1.bf16.xpose.msra.mxu0 0
        %467 = vmatprep.subr.bf16.mxu0 0
        %468 = vmatpush1.bf16.xpose.msra.mxu0 0
        %469 = vmatprep.subr.bf16.mxu0 0
        %470 = vmatpush1.bf16.xpose.msra.mxu0 0
        %471 = vmatprep.subr.bf16.mxu0 0
        %472 = vmatpush1.bf16.xpose.msra.mxu0 0
        %473 = vmatprep.subr.bf16.mxu0 0
        %474 = vmatpush1.bf16.xpose.msra.mxu0 0
        %475 = vmatprep.subr.bf16.mxu0 0
        %476 = vmatpush1.bf16.xpose.msra.mxu0 0
        %477 = vmatprep.subr.bf16.mxu0 0
        %478 = vmatpush1.bf16.xpose.msra.mxu0 0
        %479 = vmatprep.mubr.bf16.mxu0 0
        %480 = vmatmul.mubr.bf16.gmra.mrb[0].mxu0 %v442
        %v481 = vpop.f32.mrb[0].mxu0
        %v482 = vadd.f32 0.0, %v481
        %v483 = vpop.f32.mrb[0].mxu0
        %v484 = vpop.f32.mrb[0].mxu0
        %v485 = vpop.f32.mrb[0].mxu0
        %486 = vdwg.mxu0
        %v487 = vsel %vm440, %v482, -inf
        %488 = vmax.xlane.f32.xlu0 %v487
        %v489 = vpop.xlane.xlu0 %488
        %v490 = vsub.f32 %v482, %v489
        %v491 = vmul.f32 %v490, 1.442695
        %v492 = vpow.pop %v491
        %v493 = vsel %vm440, %v492, 0.0
        %494 = vadd.xlane.f32.xlu0 %v493
        %v495 = vpop.xlane.xlu0 %494
        %v496 = vrcp.pop %v495
        %v497 = vmul.f32 %v492, %v496
        %v498 = vpack.c.bf16 %v497, %v497
        %499 = vrot.lane.b32.xlu0 %v436, 64
        %v500 = vpop.permute.xlu0 %499
        %v502 = vsel %vm440, %v498, 0
        %vm504 = vcmask 1043456
        %v506 = vsel %vm504, %v500, 0
        %508 = vmatprep.subr.bf16.mxu0 0
        %509 = vmatpush1.bf16.msra.mxu0 %v506
        %510 = vmatprep.subr.bf16.mxu0 0
        %511 = vmatpush1.bf16.msra.mxu0 0
        %512 = vmatprep.subr.bf16.mxu0 0
        %513 = vmatpush1.bf16.msra.mxu0 0
        %514 = vmatprep.subr.bf16.mxu0 0
        %515 = vmatpush1.bf16.msra.mxu0 0
        %516 = vmatprep.subr.bf16.mxu0 0
        %517 = vmatpush1.bf16.msra.mxu0 0
        %518 = vmatprep.subr.bf16.mxu0 0
        %519 = vmatpush1.bf16.msra.mxu0 0
        %520 = vmatprep.subr.bf16.mxu0 0
        %521 = vmatpush1.bf16.msra.mxu0 0
        %522 = vmatprep.subr.bf16.mxu0 0
        %523 = vmatpush1.bf16.msra.mxu0 0
        %524 = vmatprep.subr.bf16.mxu0 0
        %525 = vmatpush1.bf16.msra.mxu0 0
        %526 = vmatprep.subr.bf16.mxu0 0
        %527 = vmatpush1.bf16.msra.mxu0 0
        %528 = vmatprep.subr.bf16.mxu0 0
        %529 = vmatpush1.bf16.msra.mxu0 0
        %530 = vmatprep.subr.bf16.mxu0 0
        %531 = vmatpush1.bf16.msra.mxu0 0
        %532 = vmatprep.subr.bf16.mxu0 0
        %533 = vmatpush1.bf16.msra.mxu0 0
        %534 = vmatprep.subr.bf16.mxu0 0
        %535 = vmatpush1.bf16.msra.mxu0 0
        %536 = vmatprep.subr.bf16.mxu0 0
        %537 = vmatpush1.bf16.msra.mxu0 0
        %538 = vmatprep.subr.bf16.mxu0 0
        %539 = vmatpush1.bf16.msra.mxu0 0
        %540 = vmatprep.mubr.bf16.mxu0 0
        %541 = vmatmul.mubr.bf16.gmra.mrb[0].mxu0 %v502
        %v542 = vpop.f32.mrb[0].mxu0
        %v543 = vadd.f32 0.0, %v542
        %v544 = vpop.f32.mrb[0].mxu0
        %v545 = vpop.f32.mrb[0].mxu0
        %v546 = vpop.f32.mrb[0].mxu0
        %547 = vdwg.mxu0
        %548 = vrot.lane.b32.xlu0 %v436, 120
        %v549 = vpop.permute.xlu0 %548
        %550 = vrot.lane.b32.xlu0 %v436, 88
        %v551 = vpop.permute.xlu0 %550
        %v553 = vsel %vm440, %v549, 0
        %v556 = vsel %vm440, %v551, 0
        %558 = vmatprep.subr.bf16.mxu0 0
        %559 = vmatpush1.bf16.xpose.msra.mxu0 %v556
        %560 = vmatprep.subr.bf16.mxu0 0
        %561 = vmatpush1.bf16.xpose.msra.mxu0 0
        %562 = vmatprep.subr.bf16.mxu0 0
        %563 = vmatpush1.bf16.xpose.msra.mxu0 0
        %564 = vmatprep.subr.bf16.mxu0 0
        %565 = vmatpush1.bf16.xpose.msra.mxu0 0
        %566 = vmatprep.subr.bf16.mxu0 0
        %567 = vmatpush1.bf16.xpose.msra.mxu0 0
        %568 = vmatprep.subr.bf16.mxu0 0
        %569 = vmatpush1.bf16.xpose.msra.mxu0 0
        %570 = vmatprep.subr.bf16.mxu0 0
        %571 = vmatpush1.bf16.xpose.msra.mxu0 0
        %572 = vmatprep.subr.bf16.mxu0 0
        %573 = vmatpush1.bf16.xpose.msra.mxu0 0
        %574 = vmatprep.subr.bf16.mxu0 0
        %575 = vmatpush1.bf16.xpose.msra.mxu0 0
        %576 = vmatprep.subr.bf16.mxu0 0
        %577 = vmatpush1.bf16.xpose.msra.mxu0 0
        %578 = vmatprep.subr.bf16.mxu0 0
        %579 = vmatpush1.bf16.xpose.msra.mxu0 0
        %580 = vmatprep.subr.bf16.mxu0 0
        %581 = vmatpush1.bf16.xpose.msra.mxu0 0
        %582 = vmatprep.subr.bf16.mxu0 0
        %583 = vmatpush1.bf16.xpose.msra.mxu0 0
        %584 = vmatprep.subr.bf16.mxu0 0
        %585 = vmatpush1.bf16.xpose.msra.mxu0 0
        %586 = vmatprep.subr.bf16.mxu0 0
        %587 = vmatpush1.bf16.xpose.msra.mxu0 0
        %588 = vmatprep.subr.bf16.mxu0 0
        %589 = vmatpush1.bf16.xpose.msra.mxu0 0
        %590 = vmatprep.mubr.bf16.mxu0 0
        %591 = vmatmul.mubr.bf16.gmra.mrb[0].mxu0 %v553
        %v592 = vpop.f32.mrb[0].mxu0
        %v593 = vadd.f32 0.0, %v592
        %v594 = vpop.f32.mrb[0].mxu0
        %v595 = vpop.f32.mrb[0].mxu0
        %v596 = vpop.f32.mrb[0].mxu0
        %597 = vdwg.mxu0
        %v598 = vsel %vm440, %v593, -inf
        %599 = vmax.xlane.f32.xlu0 %v598
        %v600 = vpop.xlane.xlu0 %599
        %v601 = vsub.f32 %v593, %v600
        %v602 = vmul.f32 %v601, 1.442695
        %v603 = vpow.pop %v602
        %v604 = vsel %vm440, %v603, 0.0
        %605 = vadd.xlane.f32.xlu0 %v604
        %v606 = vpop.xlane.xlu0 %605
        %v607 = vrcp.pop %v606
        %v608 = vmul.f32 %v603, %v607
        %v609 = vpack.c.bf16 %v608, %v608
        %610 = vrot.lane.b32.xlu0 %v436, 56
        %v611 = vpop.permute.xlu0 %610
        %v613 = vsel %vm440, %v609, 0
        %v616 = vsel %vm504, %v611, 0
        %618 = vmatprep.subr.bf16.mxu0 0
        %619 = vmatpush1.bf16.msra.mxu0 %v616
        %620 = vmatprep.subr.bf16.mxu0 0
        %621 = vmatpush1.bf16.msra.mxu0 0
        %622 = vmatprep.subr.bf16.mxu0 0
        %623 = vmatpush1.bf16.msra.mxu0 0
        %624 = vmatprep.subr.bf16.mxu0 0
        %625 = vmatpush1.bf16.msra.mxu0 0
        %626 = vmatprep.subr.bf16.mxu0 0
        %627 = vmatpush1.bf16.msra.mxu0 0
        %628 = vmatprep.subr.bf16.mxu0 0
        %629 = vmatpush1.bf16.msra.mxu0 0
        %630 = vmatprep.subr.bf16.mxu0 0
        %631 = vmatpush1.bf16.msra.mxu0 0
        %632 = vmatprep.subr.bf16.mxu0 0
        %633 = vmatpush1.bf16.msra.mxu0 0
        %634 = vmatprep.subr.bf16.mxu0 0
        %635 = vmatpush1.bf16.msra.mxu0 0
        %636 = vmatprep.subr.bf16.mxu0 0
        %637 = vmatpush1.bf16.msra.mxu0 0
        %638 = vmatprep.subr.bf16.mxu0 0
        %639 = vmatpush1.bf16.msra.mxu0 0
        %640 = vmatprep.subr.bf16.mxu0 0
        %641 = vmatpush1.bf16.msra.mxu0 0
        %642 = vmatprep.subr.bf16.mxu0 0
        %643 = vmatpush1.bf16.msra.mxu0 0
        %644 = vmatprep.subr.bf16.mxu0 0
        %645 = vmatpush1.bf16.msra.mxu0 0
        %646 = vmatprep.subr.bf16.mxu0 0
        %647 = vmatpush1.bf16.msra.mxu0 0
        %648 = vmatprep.subr.bf16.mxu0 0
        %649 = vmatpush1.bf16.msra.mxu0 0
        %650 = vmatprep.mubr.bf16.mxu0 0
        %651 = vmatmul.mubr.bf16.gmra.mrb[0].mxu0 %v613
        %v652 = vpop.f32.mrb[0].mxu0
        %v653 = vadd.f32 0.0, %v652
        %v654 = vpop.f32.mrb[0].mxu0
        %v655 = vpop.f32.mrb[0].mxu0
        %v656 = vpop.f32.mrb[0].mxu0
        %657 = vdwg.mxu0
        %658 = vrot.lane.b32.xlu0 %v436, 112
        %v659 = vpop.permute.xlu0 %658
        %660 = vrot.lane.b32.xlu0 %v436, 80
        %v661 = vpop.permute.xlu0 %660
        %v663 = vsel %vm440, %v659, 0
        %v666 = vsel %vm440, %v661, 0
        %668 = vmatprep.subr.bf16.mxu0 0
        %669 = vmatpush1.bf16.xpose.msra.mxu0 %v666
        %670 = vmatprep.subr.bf16.mxu0 0
        %671 = vmatpush1.bf16.xpose.msra.mxu0 0
        %672 = vmatprep.subr.bf16.mxu0 0
        %673 = vmatpush1.bf16.xpose.msra.mxu0 0
        %674 = vmatprep.subr.bf16.mxu0 0
        %675 = vmatpush1.bf16.xpose.msra.mxu0 0
        %676 = vmatprep.subr.bf16.mxu0 0
        %677 = vmatpush1.bf16.xpose.msra.mxu0 0
        %678 = vmatprep.subr.bf16.mxu0 0
        %679 = vmatpush1.bf16.xpose.msra.mxu0 0
        %680 = vmatprep.subr.bf16.mxu0 0
        %681 = vmatpush1.bf16.xpose.msra.mxu0 0
        %682 = vmatprep.subr.bf16.mxu0 0
        %683 = vmatpush1.bf16.xpose.msra.mxu0 0
        %684 = vmatprep.subr.bf16.mxu0 0
        %685 = vmatpush1.bf16.xpose.msra.mxu0 0
        %686 = vmatprep.subr.bf16.mxu0 0
        %687 = vmatpush1.bf16.xpose.msra.mxu0 0
        %688 = vmatprep.subr.bf16.mxu0 0
        %689 = vmatpush1.bf16.xpose.msra.mxu0 0
        %690 = vmatprep.subr.bf16.mxu0 0
        %691 = vmatpush1.bf16.xpose.msra.mxu0 0
        %692 = vmatprep.subr.bf16.mxu0 0
        %693 = vmatpush1.bf16.xpose.msra.mxu0 0
        %694 = vmatprep.subr.bf16.mxu0 0
        %695 = vmatpush1.bf16.xpose.msra.mxu0 0
        %696 = vmatprep.subr.bf16.mxu0 0
        %697 = vmatpush1.bf16.xpose.msra.mxu0 0
        %698 = vmatprep.subr.bf16.mxu0 0
        %699 = vmatpush1.bf16.xpose.msra.mxu0 0
        %700 = vmatprep.mubr.bf16.mxu0 0
        %701 = vmatmul.mubr.bf16.gmra.mrb[0].mxu0 %v663
        %v702 = vpop.f32.mrb[0].mxu0
        %v703 = vadd.f32 0.0, %v702
        %v704 = vpop.f32.mrb[0].mxu0
        %v705 = vpop.f32.mrb[0].mxu0
        %v706 = vpop.f32.mrb[0].mxu0
        %707 = vdwg.mxu0
        %v708 = vsel %vm440, %v703, -inf
        %709 = vmax.xlane.f32.xlu0 %v708
        %v710 = vpop.xlane.xlu0 %709
        %v711 = vsub.f32 %v703, %v710
        %v712 = vmul.f32 %v711, 1.442695
        %v713 = vpow.pop %v712
        %v714 = vsel %vm440, %v713, 0.0
        %715 = vadd.xlane.f32.xlu0 %v714
        %v716 = vpop.xlane.xlu0 %715
        %v717 = vrcp.pop %v716
        %v718 = vmul.f32 %v713, %v717
        %v719 = vpack.c.bf16 %v718, %v718
        %720 = vrot.lane.b32.xlu0 %v436, 48
        %v721 = vpop.permute.xlu0 %720
        %v723 = vsel %vm440, %v719, 0
        %v726 = vsel %vm504, %v721, 0
        %728 = vmatprep.subr.bf16.mxu0 0
        %729 = vmatpush1.bf16.msra.mxu0 %v726
        %730 = vmatprep.subr.bf16.mxu0 0
        %731 = vmatpush1.bf16.msra.mxu0 0
        %732 = vmatprep.subr.bf16.mxu0 0
        %733 = vmatpush1.bf16.msra.mxu0 0
        %734 = vmatprep.subr.bf16.mxu0 0
        %735 = vmatpush1.bf16.msra.mxu0 0
        %736 = vmatprep.subr.bf16.mxu0 0
        %737 = vmatpush1.bf16.msra.mxu0 0
        %738 = vmatprep.subr.bf16.mxu0 0
        %739 = vmatpush1.bf16.msra.mxu0 0
        %740 = vmatprep.subr.bf16.mxu0 0
        %741 = vmatpush1.bf16.msra.mxu0 0
        %742 = vmatprep.subr.bf16.mxu0 0
        %743 = vmatpush1.bf16.msra.mxu0 0
        %744 = vmatprep.subr.bf16.mxu0 0
        %745 = vmatpush1.bf16.msra.mxu0 0
        %746 = vmatprep.subr.bf16.mxu0 0
        %747 = vmatpush1.bf16.msra.mxu0 0
        %748 = vmatprep.subr.bf16.mxu0 0
        %749 = vmatpush1.bf16.msra.mxu0 0
        %750 = vmatprep.subr.bf16.mxu0 0
        %751 = vmatpush1.bf16.msra.mxu0 0
        %752 = vmatprep.subr.bf16.mxu0 0
        %753 = vmatpush1.bf16.msra.mxu0 0
        %754 = vmatprep.subr.bf16.mxu0 0
        %755 = vmatpush1.bf16.msra.mxu0 0
        %756 = vmatprep.subr.bf16.mxu0 0
        %757 = vmatpush1.bf16.msra.mxu0 0
        %758 = vmatprep.subr.bf16.mxu0 0
        %759 = vmatpush1.bf16.msra.mxu0 0
        %760 = vmatprep.mubr.bf16.mxu0 0
        %761 = vmatmul.mubr.bf16.gmra.mrb[0].mxu0 %v723
        %v762 = vpop.f32.mrb[0].mxu0
        %v763 = vadd.f32 0.0, %v762
        %v764 = vpop.f32.mrb[0].mxu0
        %v765 = vpop.f32.mrb[0].mxu0
        %v766 = vpop.f32.mrb[0].mxu0
        %767 = vdwg.mxu0
        %768 = vrot.lane.b32.xlu0 %v436, 104
        %v769 = vpop.permute.xlu0 %768
        %770 = vrot.lane.b32.xlu0 %v436, 72
        %v771 = vpop.permute.xlu0 %770
        %v773 = vsel %vm440, %v769, 0
        %v776 = vsel %vm440, %v771, 0
        %778 = vmatprep.subr.bf16.mxu0 0
        %779 = vmatpush1.bf16.xpose.msra.mxu0 %v776
        %780 = vmatprep.subr.bf16.mxu0 0
        %781 = vmatpush1.bf16.xpose.msra.mxu0 0
        %782 = vmatprep.subr.bf16.mxu0 0
        %783 = vmatpush1.bf16.xpose.msra.mxu0 0
        %784 = vmatprep.subr.bf16.mxu0 0
        %785 = vmatpush1.bf16.xpose.msra.mxu0 0
        %786 = vmatprep.subr.bf16.mxu0 0
        %787 = vmatpush1.bf16.xpose.msra.mxu0 0
        %788 = vmatprep.subr.bf16.mxu0 0
        %789 = vmatpush1.bf16.xpose.msra.mxu0 0
        %790 = vmatprep.subr.bf16.mxu0 0
        %791 = vmatpush1.bf16.xpose.msra.mxu0 0
        %792 = vmatprep.subr.bf16.mxu0 0
        %793 = vmatpush1.bf16.xpose.msra.mxu0 0
        %794 = vmatprep.subr.bf16.mxu0 0
        %795 = vmatpush1.bf16.xpose.msra.mxu0 0
        %796 = vmatprep.subr.bf16.mxu0 0
        %797 = vmatpush1.bf16.xpose.msra.mxu0 0
        %798 = vmatprep.subr.bf16.mxu0 0
        %799 = vmatpush1.bf16.xpose.msra.mxu0 0
        %800 = vmatprep.subr.bf16.mxu0 0
        %801 = vmatpush1.bf16.xpose.msra.mxu0 0
        %802 = vmatprep.subr.bf16.mxu0 0
        %803 = vmatpush1.bf16.xpose.msra.mxu0 0
        %804 = vmatprep.subr.bf16.mxu0 0
        %805 = vmatpush1.bf16.xpose.msra.mxu0 0
        %806 = vmatprep.subr.bf16.mxu0 0
        %807 = vmatpush1.bf16.xpose.msra.mxu0 0
        %808 = vmatprep.subr.bf16.mxu0 0
        %809 = vmatpush1.bf16.xpose.msra.mxu0 0
        %810 = vmatprep.mubr.bf16.mxu0 0
        %811 = vmatmul.mubr.bf16.gmra.mrb[0].mxu0 %v773
        %v812 = vpop.f32.mrb[0].mxu0
        %v813 = vadd.f32 0.0, %v812
        %v814 = vpop.f32.mrb[0].mxu0
        %v815 = vpop.f32.mrb[0].mxu0
        %v816 = vpop.f32.mrb[0].mxu0
        %817 = vdwg.mxu0
        %v818 = vsel %vm440, %v813, -inf
        %819 = vmax.xlane.f32.xlu0 %v818
        %v820 = vpop.xlane.xlu0 %819
        %v821 = vsub.f32 %v813, %v820
        %v822 = vmul.f32 %v821, 1.442695
        %v823 = vpow.pop %v822
        %v824 = vsel %vm440, %v823, 0.0
        %825 = vadd.xlane.f32.xlu0 %v824
        %v826 = vpop.xlane.xlu0 %825
        %v827 = vrcp.pop %v826
        %v828 = vmul.f32 %v823, %v827
        %v829 = vpack.c.bf16 %v828, %v828
        %830 = vrot.lane.b32.xlu0 %v436, 40
        %v831 = vpop.permute.xlu0 %830
        %v833 = vsel %vm440, %v829, 0
        %v836 = vsel %vm504, %v831, 0
        %838 = vmatprep.subr.bf16.mxu0 0
        %839 = vmatpush1.bf16.msra.mxu0 %v836
        %840 = vmatprep.subr.bf16.mxu0 0
        %841 = vmatpush1.bf16.msra.mxu0 0
        %842 = vmatprep.subr.bf16.mxu0 0
        %843 = vmatpush1.bf16.msra.mxu0 0
        %844 = vmatprep.subr.bf16.mxu0 0
        %845 = vmatpush1.bf16.msra.mxu0 0
        %846 = vmatprep.subr.bf16.mxu0 0
        %847 = vmatpush1.bf16.msra.mxu0 0
        %848 = vmatprep.subr.bf16.mxu0 0
        %849 = vmatpush1.bf16.msra.mxu0 0
        %850 = vmatprep.subr.bf16.mxu0 0
        %851 = vmatpush1.bf16.msra.mxu0 0
        %852 = vmatprep.subr.bf16.mxu0 0
        %853 = vmatpush1.bf16.msra.mxu0 0
        %854 = vmatprep.subr.bf16.mxu0 0
        %855 = vmatpush1.bf16.msra.mxu0 0
        %856 = vmatprep.subr.bf16.mxu0 0
        %857 = vmatpush1.bf16.msra.mxu0 0
        %858 = vmatprep.subr.bf16.mxu0 0
        %859 = vmatpush1.bf16.msra.mxu0 0
        %860 = vmatprep.subr.bf16.mxu0 0
        %861 = vmatpush1.bf16.msra.mxu0 0
        %862 = vmatprep.subr.bf16.mxu0 0
        %863 = vmatpush1.bf16.msra.mxu0 0
        %864 = vmatprep.subr.bf16.mxu0 0
        %865 = vmatpush1.bf16.msra.mxu0 0
        %866 = vmatprep.subr.bf16.mxu0 0
        %867 = vmatpush1.bf16.msra.mxu0 0
        %868 = vmatprep.subr.bf16.mxu0 0
        %869 = vmatpush1.bf16.msra.mxu0 0
        %870 = vmatprep.mubr.bf16.mxu0 0
        %871 = vmatmul.mubr.bf16.gmra.mrb[0].mxu0 %v833
        %v872 = vpop.f32.mrb[0].mxu0
        %v873 = vadd.f32 0.0, %v872
        %v874 = vpop.f32.mrb[0].mxu0
        %v875 = vpop.f32.mrb[0].mxu0
        %v876 = vpop.f32.mrb[0].mxu0
        %877 = vdwg.mxu0
        %879 = vrot.lane.b32.xlu0 %v653, 8
        %v880 = vpop.permute.xlu0 %879
        %883 = vrot.lane.b32.xlu0 %v763, 16
        %v884 = vpop.permute.xlu0 %883
        %887 = vrot.lane.b32.xlu0 %v873, 24
        %v888 = vpop.permute.xlu0 %887
        %v890 = vsel %vm440, %v543, %v880
        %vm891 = vcmask 130048
        %v892 = vsel %vm891, %v890, %v884
        %vm893 = vcmask 195584
        %v894 = vsel %vm893, %v892, %v888
        %v895 = vpack.c.bf16 %v894, %v894
        %v896 = vld [vmem:[#allocation7] sm:$0xf]
        %v897 = vld [vmem:[#allocation7 + $0x4] sm:$0xf]
        %v898 = vld [vmem:[#allocation7 + $0x8] sm:$0xf]
        %v899 = vld [vmem:[#allocation7 + $0xc] sm:$0xf]
        %v900 = vlaneseq
        %v901 = vshrl.u32 %v900, 7
        %v902 = vsub.s32 0, %v901
        %v903 = vrot.slane %v367, %v902
        %v908 = vunpack.c.l.b16 %v896
        %v909 = vunpack.c.l.b16 %v897
        %v910 = vunpack.c.l.b16 %v898
        %v911 = vunpack.c.l.b16 %v899
        %v912 = vpack.c.b16 %v909, %v908
        %v913 = vpack.c.b16 %v911, %v910
        %v917 = vsel %vm392, %v895, 0
        %919 = vmatprep.subr.bf16.mxu0 0
        %920 = vmatpush1.bf16.msra.mxu0 %v912
        %921 = vmatprep.subr.bf16.mxu0 0
        %922 = vmatpush1.bf16.msra.mxu0 %v913
        %923 = vmatprep.subr.bf16.mxu0 0
        %924 = vmatpush1.bf16.msra.mxu0 0
        %925 = vmatprep.subr.bf16.mxu0 0
        %926 = vmatpush1.bf16.msra.mxu0 0
        %927 = vmatprep.subr.bf16.mxu0 0
        %928 = vmatpush1.bf16.msra.mxu0 0
        %929 = vmatprep.subr.bf16.mxu0 0
        %930 = vmatpush1.bf16.msra.mxu0 0
        %931 = vmatprep.subr.bf16.mxu0 0
        %932 = vmatpush1.bf16.msra.mxu0 0
        %933 = vmatprep.subr.bf16.mxu0 0
        %934 = vmatpush1.bf16.msra.mxu0 0
        %935 = vmatprep.subr.bf16.mxu0 0
        %936 = vmatpush1.bf16.msra.mxu0 0
        %937 = vmatprep.subr.bf16.mxu0 0
        %938 = vmatpush1.bf16.msra.mxu0 0
        %939 = vmatprep.subr.bf16.mxu0 0
        %940 = vmatpush1.bf16.msra.mxu0 0
        %941 = vmatprep.subr.bf16.mxu0 0
        %942 = vmatpush1.bf16.msra.mxu0 0
        %943 = vmatprep.subr.bf16.mxu0 0
        %944 = vmatpush1.bf16.msra.mxu0 0
        %945 = vmatprep.subr.bf16.mxu0 0
        %946 = vmatpush1.bf16.msra.mxu0 0
        %947 = vmatprep.subr.bf16.mxu0 0
        %948 = vmatpush1.bf16.msra.mxu0 0
        %949 = vmatprep.subr.bf16.mxu0 0
        %950 = vmatpush1.bf16.msra.mxu0 0
        %951 = vmatprep.mubr.bf16.mxu0 0
        %952 = vmatmul.mubr.bf16.gmra.mrb[0].mxu0 %v917
        %v953 = vpop.f32.mrb[0].mxu0
        %v954 = vadd.f32 %v903, %v953
        %v955 = vpop.f32.mrb[0].mxu0
        %v956 = vpop.f32.mrb[0].mxu0
        %v957 = vpop.f32.mrb[0].mxu0
        %958 = vdwg.mxu0
        %v959 = vsel %vm392, %v954, 0.0
        %960 = vadd.xlane.f32.xlu0 %v959
        %v961 = vpop.xlane.xlu0 %960
        %v962 = vrcp.pop 32.0
        %v963 = vmul.f32 %v961, %v962
        %v964 = vsub.f32 %v954, %v963
        %v965 = vmul.f32 %v964, %v964
        %v966 = vsel %vm392, %v965, 0.0
        %967 = vadd.xlane.f32.xlu0 %v966
        %v968 = vpop.xlane.xlu0 %967
        %v969 = vmul.f32 %v968, %v962
        %v970 = vadd.f32 %v969, 1e-05
        %v971 = vrsqrt.pop %v970
        %v972 = vmul.f32 %v964, %v971
        %v973 = vlaneseq
        %v974 = vshrl.u32 %v973, 7
        %v975 = vsub.s32 1, %v974
        %v976 = vrot.slane %v367, %v975
        %v977 = vmul.f32 %v972, %v976
        %v978 = vlaneseq
        %v979 = vshrl.u32 %v978, 7
        %v980 = vsub.s32 2, %v979
        %v981 = vrot.slane %v367, %v980
        %v982 = vadd.f32 %v977, %v981
        %v983 = vadd.f32 %v366, %v982
        %v984 = vpack.c.bf16 %v983, %v983
        %v985 = vld [vmem:[#allocation8] sm:$0xf]
        %v986 = vld [vmem:[#allocation8 + $0x4] sm:$0xf]
        %v987 = vld [vmem:[#allocation8 + $0x8] sm:$0xf]
        %v988 = vld [vmem:[#allocation8 + $0xc] sm:$0xf]
        %v989 = vld [vmem:[%s5] sm:$0x1]
        %v991 = vlaneseq
        %v992 = vshrl.u32 %v991, 7
        %v993 = vsub.s32 0, %v992
        %v994 = vrot.slane %v989, %v993
        %v1000 = vunpack.c.l.b16 %v985
        %v1001 = vunpack.c.l.b16 %v986
        %v1002 = vunpack.c.l.b16 %v987
        %v1003 = vunpack.c.l.b16 %v988
        %v1004 = vpack.c.b16 %v1001, %v1000
        %v1005 = vpack.c.b16 %v1003, %v1002
        %v1009 = vsel %vm392, %v984, 0
        %1011 = vmatprep.subr.bf16.mxu0 0
        %1012 = vmatpush1.bf16.msra.mxu0 %v1004
        %1013 = vmatprep.subr.bf16.mxu0 0
        %1014 = vmatpush1.bf16.msra.mxu0 %v1005
        %1015 = vmatprep.subr.bf16.mxu0 0
        %1016 = vmatpush1.bf16.msra.mxu0 0
        %1017 = vmatprep.subr.bf16.mxu0 0
        %1018 = vmatpush1.bf16.msra.mxu0 0
        %1019 = vmatprep.subr.bf16.mxu0 0
        %1020 = vmatpush1.bf16.msra.mxu0 0
        %1021 = vmatprep.subr.bf16.mxu0 0
        %1022 = vmatpush1.bf16.msra.mxu0 0
        %1023 = vmatprep.subr.bf16.mxu0 0
        %1024 = vmatpush1.bf16.msra.mxu0 0
        %1025 = vmatprep.subr.bf16.mxu0 0
        %1026 = vmatpush1.bf16.msra.mxu0 0
        %1027 = vmatprep.subr.bf16.mxu0 0
        %1028 = vmatpush1.bf16.msra.mxu0 0
        %1029 = vmatprep.subr.bf16.mxu0 0
        %1030 = vmatpush1.bf16.msra.mxu0 0
        %1031 = vmatprep.subr.bf16.mxu0 0
        %1032 = vmatpush1.bf16.msra.mxu0 0
        %1033 = vmatprep.subr.bf16.mxu0 0
        %1034 = vmatpush1.bf16.msra.mxu0 0
        %1035 = vmatprep.subr.bf16.mxu0 0
        %1036 = vmatpush1.bf16.msra.mxu0 0
        %1037 = vmatprep.subr.bf16.mxu0 0
        %1038 = vmatpush1.bf16.msra.mxu0 0
        %1039 = vmatprep.subr.bf16.mxu0 0
        %1040 = vmatpush1.bf16.msra.mxu0 0
        %1041 = vmatprep.subr.bf16.mxu0 0
        %1042 = vmatpush1.bf16.msra.mxu0 0
        %1043 = vmatprep.mubr.bf16.mxu0 0
        %1044 = vmatmul.mubr.bf16.gmra.mrb[0].mxu0 %v1009
        %v1045 = vpop.f32.mrb[0].mxu0
        %v1046 = vadd.f32 %v994, %v1045
        %v1047 = vpop.f32.mrb[0].mxu0
        %v1048 = vpop.f32.mrb[0].mxu0
        %v1049 = vpop.f32.mrb[0].mxu0
        %1050 = vdwg.mxu0
        %v1051 = vmax.f32 %v1046, 0.0
        %v1052 = vpack.c.bf16 %v1051, %v1051
        %v1053 = vld [vmem:[%s6] sm:$0xf]
        %v1054 = vld [vmem:[%s6 + $0x4] sm:$0xf]
        %v1055 = vld [vmem:[%s6 + $0x8] sm:$0xf]
        %v1056 = vld [vmem:[%s6 + $0xc] sm:$0xf]
        %v1057 = vlaneseq
        %v1058 = vshrl.u32 %v1057, 7
        %v1059 = vsub.s32 3, %v1058
        %v1060 = vrot.slane %v367, %v1059
        %v1065 = vunpack.c.l.b16 %v1053
        %v1066 = vunpack.c.l.b16 %v1054
        %v1067 = vunpack.c.l.b16 %v1055
        %v1068 = vunpack.c.l.b16 %v1056
        %v1069 = vpack.c.b16 %v1066, %v1065
        %v1070 = vpack.c.b16 %v1068, %v1067
        %v1074 = vsel %vm392, %v1052, 0
        %1076 = vmatprep.subr.bf16.mxu0 0
        %1077 = vmatpush1.bf16.msra.mxu0 %v1069
        %1078 = vmatprep.subr.bf16.mxu0 0
        %1079 = vmatpush1.bf16.msra.mxu0 %v1070
        %1080 = vmatprep.subr.bf16.mxu0 0
        %1081 = vmatpush1.bf16.msra.mxu0 0
        %1082 = vmatprep.subr.bf16.mxu0 0
        %1083 = vmatpush1.bf16.msra.mxu0 0
        %1084 = vmatprep.subr.bf16.mxu0 0
        %1085 = vmatpush1.bf16.msra.mxu0 0
        %1086 = vmatprep.subr.bf16.mxu0 0
        %1087 = vmatpush1.bf16.msra.mxu0 0
        %1088 = vmatprep.subr.bf16.mxu0 0
        %1089 = vmatpush1.bf16.msra.mxu0 0
        %1090 = vmatprep.subr.bf16.mxu0 0
        %1091 = vmatpush1.bf16.msra.mxu0 0
        %1092 = vmatprep.subr.bf16.mxu0 0
        %1093 = vmatpush1.bf16.msra.mxu0 0
        %1094 = vmatprep.subr.bf16.mxu0 0
        %1095 = vmatpush1.bf16.msra.mxu0 0
        %1096 = vmatprep.subr.bf16.mxu0 0
        %1097 = vmatpush1.bf16.msra.mxu0 0
        %1098 = vmatprep.subr.bf16.mxu0 0
        %1099 = vmatpush1.bf16.msra.mxu0 0
        %1100 = vmatprep.subr.bf16.mxu0 0
        %1101 = vmatpush1.bf16.msra.mxu0 0
        %1102 = vmatprep.subr.bf16.mxu0 0
        %1103 = vmatpush1.bf16.msra.mxu0 0
        %1104 = vmatprep.subr.bf16.mxu0 0
        %1105 = vmatpush1.bf16.msra.mxu0 0
        %1106 = vmatprep.subr.bf16.mxu0 0
        %1107 = vmatpush1.bf16.msra.mxu0 0
        %1108 = vmatprep.mubr.bf16.mxu0 0
        %1109 = vmatmul.mubr.bf16.gmra.mrb[0].mxu0 %v1074
        %v1110 = vpop.f32.mrb[0].mxu0
        %v1111 = vadd.f32 %v1060, %v1110
        %v1112 = vpop.f32.mrb[0].mxu0
        %v1113 = vpop.f32.mrb[0].mxu0
        %v1114 = vpop.f32.mrb[0].mxu0
        %1115 = vdwg.mxu0
        %v1116 = vsel %vm392, %v1111, 0.0
        %1117 = vadd.xlane.f32.xlu0 %v1116
        %v1118 = vpop.xlane.xlu0 %1117
        %v1119 = vmul.f32 %v1118, %v962
        %v1120 = vsub.f32 %v1111, %v1119
        %v1121 = vmul.f32 %v1120, %v1120
        %v1122 = vsel %vm392, %v1121, 0.0
        %1123 = vadd.xlane.f32.xlu0 %v1122
        %v1124 = vpop.xlane.xlu0 %1123
        %v1125 = vmul.f32 %v1124, %v962
        %v1126 = vadd.f32 %v1125, 1e-05
        %v1127 = vrsqrt.pop %v1126
        %v1128 = vmul.f32 %v1120, %v1127
        %v1129 = vlaneseq
        %v1130 = vshrl.u32 %v1129, 7
        %v1131 = vsub.s32 4, %v1130
        %v1132 = vrot.slane %v367, %v1131
        %v1133 = vmul.f32 %v1128, %v1132
        %v1134 = vlaneseq
        %v1135 = vshrl.u32 %v1134, 7
        %v1136 = vsub.s32 5, %v1135
        %v1137 = vrot.slane %v367, %v1136
        %v1138 = vadd.f32 %v1133, %v1137
        %v1139 = vadd.f32 %v983, %v1138
        %1140 = vst.msk [vmem:[%s364] sm:$0xff] %vm392, %v1139
        %s1141 = sand.u32 %s208, 1
        %s1142 = scalar_lea.sflag [#allocation4], %s1141
        %s1143 = sand.u32 %s208, 1
        %s1144 = smul.addr %s1143, 8
        %s1145 = scalar_lea.vmem [#allocation10], %s1144
        // Predicated region
        $region69: #{tpu_custom_call.1} parent=51 // pred_check
          %p1146 = pneg %p218
        $region70: #{tpu_custom_call.1} parent=51 // pred_check_branch
          %1148 = sbr.rel (%p1146) target = $region72
        $region71: #{tpu_custom_call.1} parent=51 // pred_region
          %s1150 = ssub.s32 128, 128
          %1151 = vsyncadd %s1142, %s1150
          %s1152 = smul.addr %s27, 128
          %s1153 = scalar_lea.hbm %s8, %s1152
          %s1155 = sshll.u32 %s1145, 4
          %s1156 = int_to_ptr.vmem [resolvable:$true] %s1155
          %1158 = dma.vmem_to_hbm [thread:$0]  %s1156, 128, %s1153, %s1142
        $region72: #{tpu_custom_call.1} parent=51 // pred_fallthru
          _
      $region52: #{tpu_custom_call.1} parent=5 // pred_fallthru
        _
      %p1159 = scmp.le.s32.totalorder 2, %s22
      // Predicated region
      $region73: #{tpu_custom_call.1} parent=5 // pred_check
        %p1160 = pneg %p1159
      $region74: #{tpu_custom_call.1} parent=5 // pred_check_branch
        %1162 = sbr.rel (%p1160) target = $region76
      $region75: #{tpu_custom_call.1} parent=5 // pred_region
        %s1163 = ssub.s32 %s22, 2
        // Predicated region
        $region77: #{tpu_custom_call.1} parent=75 // pred_check
          %p1164 = pneg %p224
        $region78: #{tpu_custom_call.1} parent=75 // pred_check_branch
          %1166 = sbr.rel (%p1164) target = $region80
        $region79: #{tpu_custom_call.1} parent=75 // pred_region
          %s1167 = sand.u32 %s209, 1
          %s1168 = scalar_lea.sflag [#allocation4], %s1167
          %s1169 = sand.u32 %s209, 1
          %s1170 = smul.addr %s1169, 8
          %s1171 = scalar_lea.vmem [#allocation10], %s1170
          %1172 = dma.done %s1168, 128
        $region80: #{tpu_custom_call.1} parent=75 // pred_fallthru
          _
      $region76: #{tpu_custom_call.1} parent=5 // pred_fallthru
        _
    $region6: #{tpu_custom_call.1} parent=1 // loop_footer
      %s26 = sadd.s32 1, %s22
    $region7: #{tpu_custom_call.1} parent=1 // loop_footer_branch
      %21 = sbr.rel target = $region3
    $region8: #{tpu_custom_call.1} parent=1 // loop_exit
      _
    %1173 = vsyncpa [#allocation3], 1
    %s1174 = scalar_lea.sflag [#allocation3], 1
    %1175 = vsyncpa %s1174, 1
    %1176 = vsyncpa [#allocation6], 1
    %1177 = vsyncpa [#allocation9], 1
    %1178 = vsyncpa [#allocation4], 1
    %s1179 = scalar_lea.sflag [#allocation4], 1
    %1180 = vsyncpa %s1179, 1

</llo_original>
